<compile_context>
chip_gen: v7x
topology: tpu7x:2x2x1
jax: 0.10.0
libtpu: 0.0.40
codegen_flags: <defaults>
</compile_context>

<pallas_src>
import math
from functools import partial

import jax
import jax.numpy as jnp
import numpy as np
from jax.experimental import pallas as pl
from jax.experimental.pallas import tpu as pltpu

# ------------------------------- configuration -------------------------------
BATCH     = 2
SEQ       = 8                      # number of tokens
EMBED_DIM = 32                     # Embed_Dim
N_HEADS   = 4                      # head_dimension
HEAD_DIM  = EMBED_DIM // N_HEADS   # embed_per_head_dim


# --------------------------------- kernel ------------------------------------
def multihead_kernel(x_ref, w_ref, o_ref):
    # x_ref: (N, T, d)  bf16, N = B*H (head-batched in the wrapper)
    # w_ref: (N, d, 3d) bf16 fused [Wq^T/sqrt(d) | Wk^T | Wv^T] per (batch, head)
    # o_ref: (N, T, d)  f32
    d = x_ref.shape[-1]
    x = x_ref[...]

    # One batched QKV projection (single dot_general over the N batch dim);
    # bf16 operands on the MXU, f32 accumulation.
    qkv = jnp.einsum('ntd,nde->nte', x, w_ref[...],
                     preferred_element_type=jnp.float32)        # (N, T, 3d)
    q = qkv[..., 0 * d:1 * d]          # single lane slice each, no reshape
    k = qkv[..., 1 * d:2 * d]
    v = qkv[..., 2 * d:3 * d]

    # One batched scores matmul for every (batch, head) pair.
    # 1/sqrt(d) is already folded into the Q weight columns.
    s = jnp.einsum('ntd,nsd->nts', q, k,
                   preferred_element_type=jnp.float32)          # (N, T, T)

    # ONE softmax over the whole score tensor, all f32.
    m = jnp.max(s, axis=-1, keepdims=True)
    e = jnp.exp(s - m)
    p = e * pl.reciprocal(jnp.sum(e, axis=-1, keepdims=True), approx=True)

    # One batched PV matmul + a single store of the whole output.
    o_ref[...] = jnp.einsum('nts,nsd->ntd', p, v,
                            preferred_element_type=jnp.float32)


# -------------------------------- wrapper -------------------------------------
def fuse_qkv_weights(wq, wk, wv, batch):
    """Host-side (numpy) weight fusion. Call ONCE at init.

    wq/wk/wv: (H, d, d) per-head nn.Linear weights (forward = x @ W^T).
    Returns (B*H, d, 3d) bf16 fused weight with 1/sqrt(d) folded into Wq^T.
    """
    wq = np.asarray(wq, np.float32)
    wk = np.asarray(wk, np.float32)
    wv = np.asarray(wv, np.float32)
    H, d, _ = wq.shape
    scale = 1.0 / math.sqrt(d)
    per_head = np.concatenate(
        [np.transpose(wq, (0, 2, 1)) * scale,     # Wq^T / sqrt(d)
         np.transpose(wk, (0, 2, 1)),             # Wk^T
         np.transpose(wv, (0, 2, 1))], axis=-1)   # (H, d, 3d)
    return jnp.asarray(np.tile(per_head, (batch, 1, 1)), jnp.bfloat16)


@jax.jit
def multihead_forward(x, w_qkv):
    """x: (B, T, E) f32.  w_qkv: (B*H, d, 3d) bf16 from fuse_qkv_weights."""
    B, T, E = x.shape
    d = w_qkv.shape[1]
    H = E // d
    assert w_qkv.shape == (B * H, d, 3 * d)

    # Layout plumbing in the jitted wrapper (free): head-batch the input.
    xh = (x.reshape(B, T, H, d).transpose(0, 2, 1, 3)
            .reshape(B * H, T, d).astype(jnp.bfloat16))

    out = pl.pallas_call(
        multihead_kernel,
        out_shape=jax.ShapeDtypeStruct((B * H, T, d), jnp.float32),
        in_specs=[
            pl.BlockSpec(memory_space=pltpu.MemorySpace.VMEM),   # x (head-batched)
            pl.BlockSpec(memory_space=pltpu.MemorySpace.VMEM),   # fused QKV weight
        ],
        out_specs=pl.BlockSpec(memory_space=pltpu.MemorySpace.VMEM),
    )(xh, w_qkv)

    # Merge heads back to the module's concat-over-heads layout.
    return out.reshape(B, H, T, d).transpose(0, 2, 1, 3).reshape(B, T, E)


# ----------------------------- pure-JAX reference ------------------------------
def reference_forward(x, wq, wk, wv):
    H, d, _ = wq.shape
    hp = jax.lax.Precision.HIGHEST
    heads = []
    for h in range(H):
        xh = x[..., h * d:(h + 1) * d]
        q = jnp.einsum('btd,ed->bte', xh, wq[h], precision=hp)   # x @ W^T
        k = jnp.einsum('btd,ed->bte', xh, wk[h], precision=hp)
        v = jnp.einsum('btd,ed->bte', xh, wv[h], precision=hp)
        s = jnp.einsum('bte,bse->bts', q, k, precision=hp) / math.sqrt(d)
        p = jax.nn.softmax(s, axis=-1)
        heads.append(jnp.einsum('bts,bse->bte', p, v, precision=hp))
    return jnp.concatenate(heads, axis=-1)


# ----------------------------------- main --------------------------------------
if __name__ == "__main__":
    key = jax.random.PRNGKey(0)
    kx, kq, kk, kv = jax.random.split(key, 4)
    x = jax.random.normal(kx, (BATCH, SEQ, EMBED_DIM), jnp.float32)
    wq = 0.2 * jax.random.normal(kq, (N_HEADS, HEAD_DIM, HEAD_DIM), jnp.float32)
    wk = 0.2 * jax.random.normal(kk, (N_HEADS, HEAD_DIM, HEAD_DIM), jnp.float32)
    wv = 0.2 * jax.random.normal(kv, (N_HEADS, HEAD_DIM, HEAD_DIM), jnp.float32)

    # One-time init-side weight fusion (no per-call XLA dispatches).
    w_qkv = fuse_qkv_weights(wq, wk, wv, batch=BATCH)

    out = jax.block_until_ready(multihead_forward(x, w_qkv))
    assert out.shape == (BATCH, SEQ, EMBED_DIM)

    ref = jax.block_until_ready(reference_forward(x, wq, wk, wv))
    # bf16 MXU operands + approx reciprocal: tolerances cover the quantization.
    np.testing.assert_allclose(np.asarray(out), np.asarray(ref),
                               atol=2e-2, rtol=2e-2)

    print("KERNEL_OK")
</pallas_src>

<mosaic_0001>
module attributes {stable_mosaic.version = 11 : i64} {
  func.func @multihead_kernel(%arg0: memref<8x8x8xbf16, #tpu.memory_space<vmem>>, %arg1: memref<8x8x24xbf16, #tpu.memory_space<vmem>>, %arg2: memref<8x8x8xf32, #tpu.memory_space<vmem>>) attributes {dimension_semantics = [], scalar_prefetch = 0 : i64, scratch_operands = 0 : i64, tpu.core_type = #tpu.core_type<tc>} {
    %c0 = arith.constant 0 : index
    %c0_0 = arith.constant 0 : index
    %c0_1 = arith.constant 0 : index
    %0 = vector.load %arg0[%c0, %c0_0, %c0_1] : memref<8x8x8xbf16, #tpu.memory_space<vmem>>, vector<8x8x8xbf16>
    %c0_2 = arith.constant 0 : index
    %c0_3 = arith.constant 0 : index
    %c0_4 = arith.constant 0 : index
    %1 = vector.load %arg1[%c0_2, %c0_3, %c0_4] : memref<8x8x24xbf16, #tpu.memory_space<vmem>>, vector<8x8x24xbf16>
    "tpu.trace_start"() <{level = 10 : i32, message = "ntd,nde->nte"}> : () -> ()
    %cst = arith.constant dense<0.000000e+00> : vector<8x8x24xf32>
    %2 = tpu.matmul %0, %1, %cst {dimension_numbers = #tpu.dot_dimension_numbers<[2], [1], [1], [2], [0, 0, 0, 1, 1, 2], [0], [0]>} : vector<8x8x8xbf16>, vector<8x8x24xbf16>, vector<8x8x24xf32> -> vector<8x8x24xf32>
    "tpu.trace_stop"() : () -> ()
    %3 = vector.extract_strided_slice %2 {offsets = [0, 0, 0], sizes = [8, 8, 8], strides = [1, 1, 1]} : vector<8x8x24xf32> to vector<8x8x8xf32>
    %4 = vector.extract_strided_slice %2 {offsets = [0, 0, 8], sizes = [8, 8, 8], strides = [1, 1, 1]} : vector<8x8x24xf32> to vector<8x8x8xf32>
    %5 = vector.extract_strided_slice %2 {offsets = [0, 0, 16], sizes = [8, 8, 8], strides = [1, 1, 1]} : vector<8x8x24xf32> to vector<8x8x8xf32>
    "tpu.trace_start"() <{level = 10 : i32, message = "ntd,nsd->nts"}> : () -> ()
    %cst_5 = arith.constant dense<0.000000e+00> : vector<8x8x8xf32>
    %6 = tpu.matmul %3, %4, %cst_5 {dimension_numbers = #tpu.dot_dimension_numbers<[2], [2], [1], [1], [0, 0, 0, 1, 1, 1], [0], [0]>} : vector<8x8x8xf32>, vector<8x8x8xf32>, vector<8x8x8xf32> -> vector<8x8x8xf32>
    "tpu.trace_stop"() : () -> ()
    %cst_6 = arith.constant dense<0xFF800000> : vector<8x8xf32>
    %7 = vector.multi_reduction <maximumf>, %6, %cst_6 [2] : vector<8x8x8xf32> to vector<8x8xf32>
    %8 = vector.shape_cast %7 : vector<8x8xf32> to vector<8x8x1xf32>
    %9 = vector.broadcast %8 : vector<8x8x1xf32> to vector<8x8x8xf32>
    %10 = arith.subf %6, %9 : vector<8x8x8xf32>
    %11 = math.exp %10 : vector<8x8x8xf32>
    %cst_7 = arith.constant dense<0.000000e+00> : vector<8x8xf32>
    %12 = vector.multi_reduction <add>, %11, %cst_7 [2] : vector<8x8x8xf32> to vector<8x8xf32>
    %13 = vector.shape_cast %12 : vector<8x8xf32> to vector<8x8x1xf32>
    %14 = tpu.reciprocal %13 {approx = true} : vector<8x8x1xf32> -> vector<8x8x1xf32>
    %15 = vector.broadcast %14 : vector<8x8x1xf32> to vector<8x8x8xf32>
    %16 = arith.mulf %11, %15 : vector<8x8x8xf32>
    "tpu.trace_start"() <{level = 10 : i32, message = "nts,nsd->ntd"}> : () -> ()
    %cst_8 = arith.constant dense<0.000000e+00> : vector<8x8x8xf32>
    %17 = tpu.matmul %16, %5, %cst_8 {dimension_numbers = #tpu.dot_dimension_numbers<[2], [1], [1], [2], [0, 0, 0, 1, 1, 2], [0], [0]>} : vector<8x8x8xf32>, vector<8x8x8xf32>, vector<8x8x8xf32> -> vector<8x8x8xf32>
    "tpu.trace_stop"() : () -> ()
    %c0_9 = arith.constant 0 : index
    %c0_10 = arith.constant 0 : index
    %c0_11 = arith.constant 0 : index
    %18 = vector.load %arg2[%c0_9, %c0_10, %c0_11] : memref<8x8x8xf32, #tpu.memory_space<vmem>>, vector<8x8x8xf32>
    tpu.vector_store %arg2[%c0_9, %c0_10, %c0_11], %17 {strides = array<i32>} : memref<8x8x8xf32, #tpu.memory_space<vmem>>, vector<8x8x8xf32>,
    return
  }
}

</mosaic_0001>

<llo_original>
// kernel: multihead_forward.1
$region0: #{multihead_forward.1}
  #allocation0 [shape = 'u32[]', space=smem, size = 0x4, offset = 0x4, fixed_abs, tag = 'smem constant byte address 0x4 - core index']
  #allocation1 [shape = 'u32[144,128]{1,0:T(1,128)}', space=vmem, size = 0x12000, scoped, tag = 'internal scratch']
  %s0 = inlined_call_operand.vmem [shape: bf16[8,8,8], index: 0, kind: input, shape index: {}]
  %s1 = inlined_call_operand.vmem [shape: bf16[8,8,24], index: 1, kind: input, shape index: {}]
  %s2 = inlined_call_operand.vmem [shape: f32[8,8,8], index: 2, kind: output, shape index: {}]
  %s3 = sld [smem:[#allocation0]]
  $region18: #{multihead_forward.1} parent=0
    _
  %s5 = ssub.s32 1, %s3
  %s6 = scalar_select 0, %s5, %s3
  // Predicated region
  $region2: #{multihead_forward.1} parent=0 // pred_check
    _
  $region3: #{multihead_forward.1} parent=0 // pred_check_branch
    %8 = sbr.rel (0) target = $region5
  $region4: #{multihead_forward.1} parent=0 // pred_region
    _
  $region5: #{multihead_forward.1} parent=0 // pred_fallthru
    _
  // Predicated region
  $region6: #{multihead_forward.1} parent=0 // pred_check
    _
  $region7: #{multihead_forward.1} parent=0 // pred_check_branch
    %10 = sbr.rel (0) target = $region9
  $region8: #{multihead_forward.1} parent=0 // pred_region
    _
  $region9: #{multihead_forward.1} parent=0 // pred_fallthru
    _
  %v12 = vld [vmem:[%s0] sm:$0xf]
  %v13 = vld [vmem:[%s0 + $0x4] sm:$0xf]
  %v14 = vld [vmem:[%s0 + $0x8] sm:$0xf]
  %v15 = vld [vmem:[%s0 + $0xc] sm:$0xf]
  %v16 = vld [vmem:[%s0 + $0x10] sm:$0xf]
  %v17 = vld [vmem:[%s0 + $0x14] sm:$0xf]
  %v18 = vld [vmem:[%s0 + $0x18] sm:$0xf]
  %v19 = vld [vmem:[%s0 + $0x1c] sm:$0xf]
  %v20 = vld [vmem:[%s1] sm:$0xf]
  %v21 = vld [vmem:[%s1 + $0x4] sm:$0xf]
  %v22 = vld [vmem:[%s1 + $0x8] sm:$0xf]
  %v23 = vld [vmem:[%s1 + $0xc] sm:$0xf]
  %v24 = vld [vmem:[%s1 + $0x10] sm:$0xf]
  %v25 = vld [vmem:[%s1 + $0x14] sm:$0xf]
  %v26 = vld [vmem:[%s1 + $0x18] sm:$0xf]
  %v27 = vld [vmem:[%s1 + $0x1c] sm:$0xf]
  %vm28 = vcmask 64512
  %v30 = vsel %vm28, %v12, 0
  %vm32 = vcmask 1043456
  %v34 = vsel %vm32, %v20, 0
  %36 = vmatprep.subr.bf16.mxu0 0
  %37 = vmatpush1.bf16.msra.mxu0 %v34
  %38 = vmatprep.subr.bf16.mxu0 0
  %39 = vmatpush1.bf16.msra.mxu0 0
  %40 = vmatprep.subr.bf16.mxu0 0
  %41 = vmatpush1.bf16.msra.mxu0 0
  %42 = vmatprep.subr.bf16.mxu0 0
  %43 = vmatpush1.bf16.msra.mxu0 0
  %44 = vmatprep.subr.bf16.mxu0 0
  %45 = vmatpush1.bf16.msra.mxu0 0
  %46 = vmatprep.subr.bf16.mxu0 0
  %47 = vmatpush1.bf16.msra.mxu0 0
  %48 = vmatprep.subr.bf16.mxu0 0
  %49 = vmatpush1.bf16.msra.mxu0 0
  %50 = vmatprep.subr.bf16.mxu0 0
  %51 = vmatpush1.bf16.msra.mxu0 0
  %52 = vmatprep.subr.bf16.mxu0 0
  %53 = vmatpush1.bf16.msra.mxu0 0
  %54 = vmatprep.subr.bf16.mxu0 0
  %55 = vmatpush1.bf16.msra.mxu0 0
  %56 = vmatprep.subr.bf16.mxu0 0
  %57 = vmatpush1.bf16.msra.mxu0 0
  %58 = vmatprep.subr.bf16.mxu0 0
  %59 = vmatpush1.bf16.msra.mxu0 0
  %60 = vmatprep.subr.bf16.mxu0 0
  %61 = vmatpush1.bf16.msra.mxu0 0
  %62 = vmatprep.subr.bf16.mxu0 0
  %63 = vmatpush1.bf16.msra.mxu0 0
  %64 = vmatprep.subr.bf16.mxu0 0
  %65 = vmatpush1.bf16.msra.mxu0 0
  %66 = vmatprep.subr.bf16.mxu0 0
  %67 = vmatpush1.bf16.msra.mxu0 0
  %68 = vmatprep.mubr.bf16.mxu0 0
  %69 = vmatmul.mubr.bf16.gmra.mrb[0].mxu0 %v30
  %v70 = vpop.f32.mrb[0].mxu0
  %v71 = vadd.f32 0.0, %v70
  %v72 = vpop.f32.mrb[0].mxu0
  %v73 = vpop.f32.mrb[0].mxu0
  %v74 = vpop.f32.mrb[0].mxu0
  %75 = vdwg.mxu0
  %v77 = vsel %vm28, %v13, 0
  %v80 = vsel %vm32, %v21, 0
  %82 = vmatprep.subr.bf16.mxu0 0
  %83 = vmatpush1.bf16.msra.mxu0 %v80
  %84 = vmatprep.subr.bf16.mxu0 0
  %85 = vmatpush1.bf16.msra.mxu0 0
  %86 = vmatprep.subr.bf16.mxu0 0
  %87 = vmatpush1.bf16.msra.mxu0 0
  %88 = vmatprep.subr.bf16.mxu0 0
  %89 = vmatpush1.bf16.msra.mxu0 0
  %90 = vmatprep.subr.bf16.mxu0 0
  %91 = vmatpush1.bf16.msra.mxu0 0
  %92 = vmatprep.subr.bf16.mxu0 0
  %93 = vmatpush1.bf16.msra.mxu0 0
  %94 = vmatprep.subr.bf16.mxu0 0
  %95 = vmatpush1.bf16.msra.mxu0 0
  %96 = vmatprep.subr.bf16.mxu0 0
  %97 = vmatpush1.bf16.msra.mxu0 0
  %98 = vmatprep.subr.bf16.mxu0 0
  %99 = vmatpush1.bf16.msra.mxu0 0
  %100 = vmatprep.subr.bf16.mxu0 0
  %101 = vmatpush1.bf16.msra.mxu0 0
  %102 = vmatprep.subr.bf16.mxu0 0
  %103 = vmatpush1.bf16.msra.mxu0 0
  %104 = vmatprep.subr.bf16.mxu0 0
  %105 = vmatpush1.bf16.msra.mxu0 0
  %106 = vmatprep.subr.bf16.mxu0 0
  %107 = vmatpush1.bf16.msra.mxu0 0
  %108 = vmatprep.subr.bf16.mxu0 0
  %109 = vmatpush1.bf16.msra.mxu0 0
  %110 = vmatprep.subr.bf16.mxu0 0
  %111 = vmatpush1.bf16.msra.mxu0 0
  %112 = vmatprep.subr.bf16.mxu0 0
  %113 = vmatpush1.bf16.msra.mxu0 0
  %114 = vmatprep.mubr.bf16.mxu0 0
  %115 = vmatmul.mubr.bf16.gmra.mrb[0].mxu0 %v77
  %v116 = vpop.f32.mrb[0].mxu0
  %v117 = vadd.f32 0.0, %v116
  %v118 = vpop.f32.mrb[0].mxu0
  %v119 = vpop.f32.mrb[0].mxu0
  %v120 = vpop.f32.mrb[0].mxu0
  %121 = vdwg.mxu0
  %v123 = vsel %vm28, %v14, 0
  %v126 = vsel %vm32, %v22, 0
  %128 = vmatprep.subr.bf16.mxu0 0
  %129 = vmatpush1.bf16.msra.mxu0 %v126
  %130 = vmatprep.subr.bf16.mxu0 0
  %131 = vmatpush1.bf16.msra.mxu0 0
  %132 = vmatprep.subr.bf16.mxu0 0
  %133 = vmatpush1.bf16.msra.mxu0 0
  %134 = vmatprep.subr.bf16.mxu0 0
  %135 = vmatpush1.bf16.msra.mxu0 0
  %136 = vmatprep.subr.bf16.mxu0 0
  %137 = vmatpush1.bf16.msra.mxu0 0
  %138 = vmatprep.subr.bf16.mxu0 0
  %139 = vmatpush1.bf16.msra.mxu0 0
  %140 = vmatprep.subr.bf16.mxu0 0
  %141 = vmatpush1.bf16.msra.mxu0 0
  %142 = vmatprep.subr.bf16.mxu0 0
  %143 = vmatpush1.bf16.msra.mxu0 0
  %144 = vmatprep.subr.bf16.mxu0 0
  %145 = vmatpush1.bf16.msra.mxu0 0
  %146 = vmatprep.subr.bf16.mxu0 0
  %147 = vmatpush1.bf16.msra.mxu0 0
  %148 = vmatprep.subr.bf16.mxu0 0
  %149 = vmatpush1.bf16.msra.mxu0 0
  %150 = vmatprep.subr.bf16.mxu0 0
  %151 = vmatpush1.bf16.msra.mxu0 0
  %152 = vmatprep.subr.bf16.mxu0 0
  %153 = vmatpush1.bf16.msra.mxu0 0
  %154 = vmatprep.subr.bf16.mxu0 0
  %155 = vmatpush1.bf16.msra.mxu0 0
  %156 = vmatprep.subr.bf16.mxu0 0
  %157 = vmatpush1.bf16.msra.mxu0 0
  %158 = vmatprep.subr.bf16.mxu0 0
  %159 = vmatpush1.bf16.msra.mxu0 0
  %160 = vmatprep.mubr.bf16.mxu0 0
  %161 = vmatmul.mubr.bf16.gmra.mrb[0].mxu0 %v123
  %v162 = vpop.f32.mrb[0].mxu0
  %v163 = vadd.f32 0.0, %v162
  %v164 = vpop.f32.mrb[0].mxu0
  %v165 = vpop.f32.mrb[0].mxu0
  %v166 = vpop.f32.mrb[0].mxu0
  %167 = vdwg.mxu0
  %v169 = vsel %vm28, %v15, 0
  %v172 = vsel %vm32, %v23, 0
  %174 = vmatprep.subr.bf16.mxu0 0
  %175 = vmatpush1.bf16.msra.mxu0 %v172
  %176 = vmatprep.subr.bf16.mxu0 0
  %177 = vmatpush1.bf16.msra.mxu0 0
  %178 = vmatprep.subr.bf16.mxu0 0
  %179 = vmatpush1.bf16.msra.mxu0 0
  %180 = vmatprep.subr.bf16.mxu0 0
  %181 = vmatpush1.bf16.msra.mxu0 0
  %182 = vmatprep.subr.bf16.mxu0 0
  %183 = vmatpush1.bf16.msra.mxu0 0
  %184 = vmatprep.subr.bf16.mxu0 0
  %185 = vmatpush1.bf16.msra.mxu0 0
  %186 = vmatprep.subr.bf16.mxu0 0
  %187 = vmatpush1.bf16.msra.mxu0 0
  %188 = vmatprep.subr.bf16.mxu0 0
  %189 = vmatpush1.bf16.msra.mxu0 0
  %190 = vmatprep.subr.bf16.mxu0 0
  %191 = vmatpush1.bf16.msra.mxu0 0
  %192 = vmatprep.subr.bf16.mxu0 0
  %193 = vmatpush1.bf16.msra.mxu0 0
  %194 = vmatprep.subr.bf16.mxu0 0
  %195 = vmatpush1.bf16.msra.mxu0 0
  %196 = vmatprep.subr.bf16.mxu0 0
  %197 = vmatpush1.bf16.msra.mxu0 0
  %198 = vmatprep.subr.bf16.mxu0 0
  %199 = vmatpush1.bf16.msra.mxu0 0
  %200 = vmatprep.subr.bf16.mxu0 0
  %201 = vmatpush1.bf16.msra.mxu0 0
  %202 = vmatprep.subr.bf16.mxu0 0
  %203 = vmatpush1.bf16.msra.mxu0 0
  %204 = vmatprep.subr.bf16.mxu0 0
  %205 = vmatpush1.bf16.msra.mxu0 0
  %206 = vmatprep.mubr.bf16.mxu0 0
  %207 = vmatmul.mubr.bf16.gmra.mrb[0].mxu0 %v169
  %v208 = vpop.f32.mrb[0].mxu0
  %v209 = vadd.f32 0.0, %v208
  %v210 = vpop.f32.mrb[0].mxu0
  %v211 = vpop.f32.mrb[0].mxu0
  %v212 = vpop.f32.mrb[0].mxu0
  %213 = vdwg.mxu0
  %v215 = vsel %vm28, %v16, 0
  %v218 = vsel %vm32, %v24, 0
  %220 = vmatprep.subr.bf16.mxu0 0
  %221 = vmatpush1.bf16.msra.mxu0 %v218
  %222 = vmatprep.subr.bf16.mxu0 0
  %223 = vmatpush1.bf16.msra.mxu0 0
  %224 = vmatprep.subr.bf16.mxu0 0
  %225 = vmatpush1.bf16.msra.mxu0 0
  %226 = vmatprep.subr.bf16.mxu0 0
  %227 = vmatpush1.bf16.msra.mxu0 0
  %228 = vmatprep.subr.bf16.mxu0 0
  %229 = vmatpush1.bf16.msra.mxu0 0
  %230 = vmatprep.subr.bf16.mxu0 0
  %231 = vmatpush1.bf16.msra.mxu0 0
  %232 = vmatprep.subr.bf16.mxu0 0
  %233 = vmatpush1.bf16.msra.mxu0 0
  %234 = vmatprep.subr.bf16.mxu0 0
  %235 = vmatpush1.bf16.msra.mxu0 0
  %236 = vmatprep.subr.bf16.mxu0 0
  %237 = vmatpush1.bf16.msra.mxu0 0
  %238 = vmatprep.subr.bf16.mxu0 0
  %239 = vmatpush1.bf16.msra.mxu0 0
  %240 = vmatprep.subr.bf16.mxu0 0
  %241 = vmatpush1.bf16.msra.mxu0 0
  %242 = vmatprep.subr.bf16.mxu0 0
  %243 = vmatpush1.bf16.msra.mxu0 0
  %244 = vmatprep.subr.bf16.mxu0 0
  %245 = vmatpush1.bf16.msra.mxu0 0
  %246 = vmatprep.subr.bf16.mxu0 0
  %247 = vmatpush1.bf16.msra.mxu0 0
  %248 = vmatprep.subr.bf16.mxu0 0
  %249 = vmatpush1.bf16.msra.mxu0 0
  %250 = vmatprep.subr.bf16.mxu0 0
  %251 = vmatpush1.bf16.msra.mxu0 0
  %252 = vmatprep.mubr.bf16.mxu0 0
  %253 = vmatmul.mubr.bf16.gmra.mrb[0].mxu0 %v215
  %v254 = vpop.f32.mrb[0].mxu0
  %v255 = vadd.f32 0.0, %v254
  %v256 = vpop.f32.mrb[0].mxu0
  %v257 = vpop.f32.mrb[0].mxu0
  %v258 = vpop.f32.mrb[0].mxu0
  %259 = vdwg.mxu0
  %v261 = vsel %vm28, %v17, 0
  %v264 = vsel %vm32, %v25, 0
  %266 = vmatprep.subr.bf16.mxu0 0
  %267 = vmatpush1.bf16.msra.mxu0 %v264
  %268 = vmatprep.subr.bf16.mxu0 0
  %269 = vmatpush1.bf16.msra.mxu0 0
  %270 = vmatprep.subr.bf16.mxu0 0
  %271 = vmatpush1.bf16.msra.mxu0 0
  %272 = vmatprep.subr.bf16.mxu0 0
  %273 = vmatpush1.bf16.msra.mxu0 0
  %274 = vmatprep.subr.bf16.mxu0 0
  %275 = vmatpush1.bf16.msra.mxu0 0
  %276 = vmatprep.subr.bf16.mxu0 0
  %277 = vmatpush1.bf16.msra.mxu0 0
  %278 = vmatprep.subr.bf16.mxu0 0
  %279 = vmatpush1.bf16.msra.mxu0 0
  %280 = vmatprep.subr.bf16.mxu0 0
  %281 = vmatpush1.bf16.msra.mxu0 0
  %282 = vmatprep.subr.bf16.mxu0 0
  %283 = vmatpush1.bf16.msra.mxu0 0
  %284 = vmatprep.subr.bf16.mxu0 0
  %285 = vmatpush1.bf16.msra.mxu0 0
  %286 = vmatprep.subr.bf16.mxu0 0
  %287 = vmatpush1.bf16.msra.mxu0 0
  %288 = vmatprep.subr.bf16.mxu0 0
  %289 = vmatpush1.bf16.msra.mxu0 0
  %290 = vmatprep.subr.bf16.mxu0 0
  %291 = vmatpush1.bf16.msra.mxu0 0
  %292 = vmatprep.subr.bf16.mxu0 0
  %293 = vmatpush1.bf16.msra.mxu0 0
  %294 = vmatprep.subr.bf16.mxu0 0
  %295 = vmatpush1.bf16.msra.mxu0 0
  %296 = vmatprep.subr.bf16.mxu0 0
  %297 = vmatpush1.bf16.msra.mxu0 0
  %298 = vmatprep.mubr.bf16.mxu0 0
  %299 = vmatmul.mubr.bf16.gmra.mrb[0].mxu0 %v261
  %v300 = vpop.f32.mrb[0].mxu0
  %v301 = vadd.f32 0.0, %v300
  %v302 = vpop.f32.mrb[0].mxu0
  %v303 = vpop.f32.mrb[0].mxu0
  %v304 = vpop.f32.mrb[0].mxu0
  %305 = vdwg.mxu0
  %v307 = vsel %vm28, %v18, 0
  %v310 = vsel %vm32, %v26, 0
  %312 = vmatprep.subr.bf16.mxu0 0
  %313 = vmatpush1.bf16.msra.mxu0 %v310
  %314 = vmatprep.subr.bf16.mxu0 0
  %315 = vmatpush1.bf16.msra.mxu0 0
  %316 = vmatprep.subr.bf16.mxu0 0
  %317 = vmatpush1.bf16.msra.mxu0 0
  %318 = vmatprep.subr.bf16.mxu0 0
  %319 = vmatpush1.bf16.msra.mxu0 0
  %320 = vmatprep.subr.bf16.mxu0 0
  %321 = vmatpush1.bf16.msra.mxu0 0
  %322 = vmatprep.subr.bf16.mxu0 0
  %323 = vmatpush1.bf16.msra.mxu0 0
  %324 = vmatprep.subr.bf16.mxu0 0
  %325 = vmatpush1.bf16.msra.mxu0 0
  %326 = vmatprep.subr.bf16.mxu0 0
  %327 = vmatpush1.bf16.msra.mxu0 0
  %328 = vmatprep.subr.bf16.mxu0 0
  %329 = vmatpush1.bf16.msra.mxu0 0
  %330 = vmatprep.subr.bf16.mxu0 0
  %331 = vmatpush1.bf16.msra.mxu0 0
  %332 = vmatprep.subr.bf16.mxu0 0
  %333 = vmatpush1.bf16.msra.mxu0 0
  %334 = vmatprep.subr.bf16.mxu0 0
  %335 = vmatpush1.bf16.msra.mxu0 0
  %336 = vmatprep.subr.bf16.mxu0 0
  %337 = vmatpush1.bf16.msra.mxu0 0
  %338 = vmatprep.subr.bf16.mxu0 0
  %339 = vmatpush1.bf16.msra.mxu0 0
  %340 = vmatprep.subr.bf16.mxu0 0
  %341 = vmatpush1.bf16.msra.mxu0 0
  %342 = vmatprep.subr.bf16.mxu0 0
  %343 = vmatpush1.bf16.msra.mxu0 0
  %344 = vmatprep.mubr.bf16.mxu0 0
  %345 = vmatmul.mubr.bf16.gmra.mrb[0].mxu0 %v307
  %v346 = vpop.f32.mrb[0].mxu0
  %v347 = vadd.f32 0.0, %v346
  %v348 = vpop.f32.mrb[0].mxu0
  %v349 = vpop.f32.mrb[0].mxu0
  %v350 = vpop.f32.mrb[0].mxu0
  %351 = vdwg.mxu0
  %v353 = vsel %vm28, %v19, 0
  %v356 = vsel %vm32, %v27, 0
  %358 = vmatprep.subr.bf16.mxu0 0
  %359 = vmatpush1.bf16.msra.mxu0 %v356
  %360 = vmatprep.subr.bf16.mxu0 0
  %361 = vmatpush1.bf16.msra.mxu0 0
  %362 = vmatprep.subr.bf16.mxu0 0
  %363 = vmatpush1.bf16.msra.mxu0 0
  %364 = vmatprep.subr.bf16.mxu0 0
  %365 = vmatpush1.bf16.msra.mxu0 0
  %366 = vmatprep.subr.bf16.mxu0 0
  %367 = vmatpush1.bf16.msra.mxu0 0
  %368 = vmatprep.subr.bf16.mxu0 0
  %369 = vmatpush1.bf16.msra.mxu0 0
  %370 = vmatprep.subr.bf16.mxu0 0
  %371 = vmatpush1.bf16.msra.mxu0 0
  %372 = vmatprep.subr.bf16.mxu0 0
  %373 = vmatpush1.bf16.msra.mxu0 0
  %374 = vmatprep.subr.bf16.mxu0 0
  %375 = vmatpush1.bf16.msra.mxu0 0
  %376 = vmatprep.subr.bf16.mxu0 0
  %377 = vmatpush1.bf16.msra.mxu0 0
  %378 = vmatprep.subr.bf16.mxu0 0
  %379 = vmatpush1.bf16.msra.mxu0 0
  %380 = vmatprep.subr.bf16.mxu0 0
  %381 = vmatpush1.bf16.msra.mxu0 0
  %382 = vmatprep.subr.bf16.mxu0 0
  %383 = vmatpush1.bf16.msra.mxu0 0
  %384 = vmatprep.subr.bf16.mxu0 0
  %385 = vmatpush1.bf16.msra.mxu0 0
  %386 = vmatprep.subr.bf16.mxu0 0
  %387 = vmatpush1.bf16.msra.mxu0 0
  %388 = vmatprep.subr.bf16.mxu0 0
  %389 = vmatpush1.bf16.msra.mxu0 0
  %390 = vmatprep.mubr.bf16.mxu0 0
  %391 = vmatmul.mubr.bf16.gmra.mrb[0].mxu0 %v353
  %v392 = vpop.f32.mrb[0].mxu0
  %v393 = vadd.f32 0.0, %v392
  %v394 = vpop.f32.mrb[0].mxu0
  %v395 = vpop.f32.mrb[0].mxu0
  %v396 = vpop.f32.mrb[0].mxu0
  %397 = vdwg.mxu0
  %399 = vrot.lane.b32.xlu0 %v71, 120
  %v400 = vpop.permute.xlu0 %399
  %v401 = vsel %vm28, %v71, 0
  %v403 = vsel %vm28, %v400, 0
  %405 = vmatprep.subr.mxu0 0.0
  %406 = vmatpush1.xpose.msra.mxu0 %v403
  %407 = vmatprep.subr.mxu0 0.0
  %408 = vmatpush1.xpose.msra.mxu0 0.0
  %409 = vmatprep.subr.mxu0 0.0
  %410 = vmatpush1.xpose.msra.mxu0 0.0
  %411 = vmatprep.subr.mxu0 0.0
  %412 = vmatpush1.xpose.msra.mxu0 0.0
  %413 = vmatprep.subr.mxu0 0.0
  %414 = vmatpush1.xpose.msra.mxu0 0.0
  %415 = vmatprep.subr.mxu0 0.0
  %416 = vmatpush1.xpose.msra.mxu0 0.0
  %417 = vmatprep.subr.mxu0 0.0
  %418 = vmatpush1.xpose.msra.mxu0 0.0
  %419 = vmatprep.subr.mxu0 0.0
  %420 = vmatpush1.xpose.msra.mxu0 0.0
  %421 = vmatprep.subr.mxu0 0.0
  %422 = vmatpush1.xpose.msra.mxu0 0.0
  %423 = vmatprep.subr.mxu0 0.0
  %424 = vmatpush1.xpose.msra.mxu0 0.0
  %425 = vmatprep.subr.mxu0 0.0
  %426 = vmatpush1.xpose.msra.mxu0 0.0
  %427 = vmatprep.subr.mxu0 0.0
  %428 = vmatpush1.xpose.msra.mxu0 0.0
  %429 = vmatprep.subr.mxu0 0.0
  %430 = vmatpush1.xpose.msra.mxu0 0.0
  %431 = vmatprep.subr.mxu0 0.0
  %432 = vmatpush1.xpose.msra.mxu0 0.0
  %433 = vmatprep.subr.mxu0 0.0
  %434 = vmatpush1.xpose.msra.mxu0 0.0
  %435 = vmatprep.subr.mxu0 0.0
  %436 = vmatpush1.xpose.msra.mxu0 0.0
  %437 = vmatprep.subr.mxu0 0.0
  %438 = vmatpush1.xpose.msra.mxu0 0.0
  %439 = vmatprep.subr.mxu0 0.0
  %440 = vmatpush1.xpose.msra.mxu0 0.0
  %441 = vmatprep.subr.mxu0 0.0
  %442 = vmatpush1.xpose.msra.mxu0 0.0
  %443 = vmatprep.subr.mxu0 0.0
  %444 = vmatpush1.xpose.msra.mxu0 0.0
  %445 = vmatprep.subr.mxu0 0.0
  %446 = vmatpush1.xpose.msra.mxu0 0.0
  %447 = vmatprep.subr.mxu0 0.0
  %448 = vmatpush1.xpose.msra.mxu0 0.0
  %449 = vmatprep.subr.mxu0 0.0
  %450 = vmatpush1.xpose.msra.mxu0 0.0
  %451 = vmatprep.subr.mxu0 0.0
  %452 = vmatpush1.xpose.msra.mxu0 0.0
  %453 = vmatprep.subr.mxu0 0.0
  %454 = vmatpush1.xpose.msra.mxu0 0.0
  %455 = vmatprep.subr.mxu0 0.0
  %456 = vmatpush1.xpose.msra.mxu0 0.0
  %457 = vmatprep.subr.mxu0 0.0
  %458 = vmatpush1.xpose.msra.mxu0 0.0
  %459 = vmatprep.subr.mxu0 0.0
  %460 = vmatpush1.xpose.msra.mxu0 0.0
  %461 = vmatprep.subr.mxu0 0.0
  %462 = vmatpush1.xpose.msra.mxu0 0.0
  %463 = vmatprep.subr.mxu0 0.0
  %464 = vmatpush1.xpose.msra.mxu0 0.0
  %465 = vmatprep.subr.mxu0 0.0
  %466 = vmatpush1.xpose.msra.mxu0 0.0
  %467 = vmatprep.subr.mxu0 0.0
  %468 = vmatpush1.xpose.msra.mxu0 0.0
  %469 = vmatprep.mubr.f32.mxu0 0.0
  %470 = vmatmul.mubr.f32.gmra.mrb[0].mxu0 %v401
  %v471 = vpop.f32.mrb[0].mxu0
  %v472 = vadd.f32 0.0, %v471
  %v473 = vpop.f32.mrb[0].mxu0
  %474 = vdwg.mxu0
  %476 = vrot.lane.b32.xlu0 %v117, 120
  %v477 = vpop.permute.xlu0 %476
  %v478 = vsel %vm28, %v117, 0
  %v480 = vsel %vm28, %v477, 0
  %482 = vmatprep.subr.mxu0 0.0
  %483 = vmatpush1.xpose.msra.mxu0 %v480
  %484 = vmatprep.subr.mxu0 0.0
  %485 = vmatpush1.xpose.msra.mxu0 0.0
  %486 = vmatprep.subr.mxu0 0.0
  %487 = vmatpush1.xpose.msra.mxu0 0.0
  %488 = vmatprep.subr.mxu0 0.0
  %489 = vmatpush1.xpose.msra.mxu0 0.0
  %490 = vmatprep.subr.mxu0 0.0
  %491 = vmatpush1.xpose.msra.mxu0 0.0
  %492 = vmatprep.subr.mxu0 0.0
  %493 = vmatpush1.xpose.msra.mxu0 0.0
  %494 = vmatprep.subr.mxu0 0.0
  %495 = vmatpush1.xpose.msra.mxu0 0.0
  %496 = vmatprep.subr.mxu0 0.0
  %497 = vmatpush1.xpose.msra.mxu0 0.0
  %498 = vmatprep.subr.mxu0 0.0
  %499 = vmatpush1.xpose.msra.mxu0 0.0
  %500 = vmatprep.subr.mxu0 0.0
  %501 = vmatpush1.xpose.msra.mxu0 0.0
  %502 = vmatprep.subr.mxu0 0.0
  %503 = vmatpush1.xpose.msra.mxu0 0.0
  %504 = vmatprep.subr.mxu0 0.0
  %505 = vmatpush1.xpose.msra.mxu0 0.0
  %506 = vmatprep.subr.mxu0 0.0
  %507 = vmatpush1.xpose.msra.mxu0 0.0
  %508 = vmatprep.subr.mxu0 0.0
  %509 = vmatpush1.xpose.msra.mxu0 0.0
  %510 = vmatprep.subr.mxu0 0.0
  %511 = vmatpush1.xpose.msra.mxu0 0.0
  %512 = vmatprep.subr.mxu0 0.0
  %513 = vmatpush1.xpose.msra.mxu0 0.0
  %514 = vmatprep.subr.mxu0 0.0
  %515 = vmatpush1.xpose.msra.mxu0 0.0
  %516 = vmatprep.subr.mxu0 0.0
  %517 = vmatpush1.xpose.msra.mxu0 0.0
  %518 = vmatprep.subr.mxu0 0.0
  %519 = vmatpush1.xpose.msra.mxu0 0.0
  %520 = vmatprep.subr.mxu0 0.0
  %521 = vmatpush1.xpose.msra.mxu0 0.0
  %522 = vmatprep.subr.mxu0 0.0
  %523 = vmatpush1.xpose.msra.mxu0 0.0
  %524 = vmatprep.subr.mxu0 0.0
  %525 = vmatpush1.xpose.msra.mxu0 0.0
  %526 = vmatprep.subr.mxu0 0.0
  %527 = vmatpush1.xpose.msra.mxu0 0.0
  %528 = vmatprep.subr.mxu0 0.0
  %529 = vmatpush1.xpose.msra.mxu0 0.0
  %530 = vmatprep.subr.mxu0 0.0
  %531 = vmatpush1.xpose.msra.mxu0 0.0
  %532 = vmatprep.subr.mxu0 0.0
  %533 = vmatpush1.xpose.msra.mxu0 0.0
  %534 = vmatprep.subr.mxu0 0.0
  %535 = vmatpush1.xpose.msra.mxu0 0.0
  %536 = vmatprep.subr.mxu0 0.0
  %537 = vmatpush1.xpose.msra.mxu0 0.0
  %538 = vmatprep.subr.mxu0 0.0
  %539 = vmatpush1.xpose.msra.mxu0 0.0
  %540 = vmatprep.subr.mxu0 0.0
  %541 = vmatpush1.xpose.msra.mxu0 0.0
  %542 = vmatprep.subr.mxu0 0.0
  %543 = vmatpush1.xpose.msra.mxu0 0.0
  %544 = vmatprep.subr.mxu0 0.0
  %545 = vmatpush1.xpose.msra.mxu0 0.0
  %546 = vmatprep.mubr.f32.mxu0 0.0
  %547 = vmatmul.mubr.f32.gmra.mrb[0].mxu0 %v478
  %v548 = vpop.f32.mrb[0].mxu0
  %v549 = vadd.f32 0.0, %v548
  %v550 = vpop.f32.mrb[0].mxu0
  %551 = vdwg.mxu0
  %553 = vrot.lane.b32.xlu0 %v163, 120
  %v554 = vpop.permute.xlu0 %553
  %v555 = vsel %vm28, %v163, 0
  %v557 = vsel %vm28, %v554, 0
  %559 = vmatprep.subr.mxu0 0.0
  %560 = vmatpush1.xpose.msra.mxu0 %v557
  %561 = vmatprep.subr.mxu0 0.0
  %562 = vmatpush1.xpose.msra.mxu0 0.0
  %563 = vmatprep.subr.mxu0 0.0
  %564 = vmatpush1.xpose.msra.mxu0 0.0
  %565 = vmatprep.subr.mxu0 0.0
  %566 = vmatpush1.xpose.msra.mxu0 0.0
  %567 = vmatprep.subr.mxu0 0.0
  %568 = vmatpush1.xpose.msra.mxu0 0.0
  %569 = vmatprep.subr.mxu0 0.0
  %570 = vmatpush1.xpose.msra.mxu0 0.0
  %571 = vmatprep.subr.mxu0 0.0
  %572 = vmatpush1.xpose.msra.mxu0 0.0
  %573 = vmatprep.subr.mxu0 0.0
  %574 = vmatpush1.xpose.msra.mxu0 0.0
  %575 = vmatprep.subr.mxu0 0.0
  %576 = vmatpush1.xpose.msra.mxu0 0.0
  %577 = vmatprep.subr.mxu0 0.0
  %578 = vmatpush1.xpose.msra.mxu0 0.0
  %579 = vmatprep.subr.mxu0 0.0
  %580 = vmatpush1.xpose.msra.mxu0 0.0
  %581 = vmatprep.subr.mxu0 0.0
  %582 = vmatpush1.xpose.msra.mxu0 0.0
  %583 = vmatprep.subr.mxu0 0.0
  %584 = vmatpush1.xpose.msra.mxu0 0.0
  %585 = vmatprep.subr.mxu0 0.0
  %586 = vmatpush1.xpose.msra.mxu0 0.0
  %587 = vmatprep.subr.mxu0 0.0
  %588 = vmatpush1.xpose.msra.mxu0 0.0
  %589 = vmatprep.subr.mxu0 0.0
  %590 = vmatpush1.xpose.msra.mxu0 0.0
  %591 = vmatprep.subr.mxu0 0.0
  %592 = vmatpush1.xpose.msra.mxu0 0.0
  %593 = vmatprep.subr.mxu0 0.0
  %594 = vmatpush1.xpose.msra.mxu0 0.0
  %595 = vmatprep.subr.mxu0 0.0
  %596 = vmatpush1.xpose.msra.mxu0 0.0
  %597 = vmatprep.subr.mxu0 0.0
  %598 = vmatpush1.xpose.msra.mxu0 0.0
  %599 = vmatprep.subr.mxu0 0.0
  %600 = vmatpush1.xpose.msra.mxu0 0.0
  %601 = vmatprep.subr.mxu0 0.0
  %602 = vmatpush1.xpose.msra.mxu0 0.0
  %603 = vmatprep.subr.mxu0 0.0
  %604 = vmatpush1.xpose.msra.mxu0 0.0
  %605 = vmatprep.subr.mxu0 0.0
  %606 = vmatpush1.xpose.msra.mxu0 0.0
  %607 = vmatprep.subr.mxu0 0.0
  %608 = vmatpush1.xpose.msra.mxu0 0.0
  %609 = vmatprep.subr.mxu0 0.0
  %610 = vmatpush1.xpose.msra.mxu0 0.0
  %611 = vmatprep.subr.mxu0 0.0
  %612 = vmatpush1.xpose.msra.mxu0 0.0
  %613 = vmatprep.subr.mxu0 0.0
  %614 = vmatpush1.xpose.msra.mxu0 0.0
  %615 = vmatprep.subr.mxu0 0.0
  %616 = vmatpush1.xpose.msra.mxu0 0.0
  %617 = vmatprep.subr.mxu0 0.0
  %618 = vmatpush1.xpose.msra.mxu0 0.0
  %619 = vmatprep.subr.mxu0 0.0
  %620 = vmatpush1.xpose.msra.mxu0 0.0
  %621 = vmatprep.subr.mxu0 0.0
  %622 = vmatpush1.xpose.msra.mxu0 0.0
  %623 = vmatprep.mubr.f32.mxu0 0.0
  %624 = vmatmul.mubr.f32.gmra.mrb[0].mxu0 %v555
  %v625 = vpop.f32.mrb[0].mxu0
  %v626 = vadd.f32 0.0, %v625
  %v627 = vpop.f32.mrb[0].mxu0
  %628 = vdwg.mxu0
  %630 = vrot.lane.b32.xlu0 %v209, 120
  %v631 = vpop.permute.xlu0 %630
  %v632 = vsel %vm28, %v209, 0
  %v634 = vsel %vm28, %v631, 0
  %636 = vmatprep.subr.mxu0 0.0
  %637 = vmatpush1.xpose.msra.mxu0 %v634
  %638 = vmatprep.subr.mxu0 0.0
  %639 = vmatpush1.xpose.msra.mxu0 0.0
  %640 = vmatprep.subr.mxu0 0.0
  %641 = vmatpush1.xpose.msra.mxu0 0.0
  %642 = vmatprep.subr.mxu0 0.0
  %643 = vmatpush1.xpose.msra.mxu0 0.0
  %644 = vmatprep.subr.mxu0 0.0
  %645 = vmatpush1.xpose.msra.mxu0 0.0
  %646 = vmatprep.subr.mxu0 0.0
  %647 = vmatpush1.xpose.msra.mxu0 0.0
  %648 = vmatprep.subr.mxu0 0.0
  %649 = vmatpush1.xpose.msra.mxu0 0.0
  %650 = vmatprep.subr.mxu0 0.0
  %651 = vmatpush1.xpose.msra.mxu0 0.0
  %652 = vmatprep.subr.mxu0 0.0
  %653 = vmatpush1.xpose.msra.mxu0 0.0
  %654 = vmatprep.subr.mxu0 0.0
  %655 = vmatpush1.xpose.msra.mxu0 0.0
  %656 = vmatprep.subr.mxu0 0.0
  %657 = vmatpush1.xpose.msra.mxu0 0.0
  %658 = vmatprep.subr.mxu0 0.0
  %659 = vmatpush1.xpose.msra.mxu0 0.0
  %660 = vmatprep.subr.mxu0 0.0
  %661 = vmatpush1.xpose.msra.mxu0 0.0
  %662 = vmatprep.subr.mxu0 0.0
  %663 = vmatpush1.xpose.msra.mxu0 0.0
  %664 = vmatprep.subr.mxu0 0.0
  %665 = vmatpush1.xpose.msra.mxu0 0.0
  %666 = vmatprep.subr.mxu0 0.0
  %667 = vmatpush1.xpose.msra.mxu0 0.0
  %668 = vmatprep.subr.mxu0 0.0
  %669 = vmatpush1.xpose.msra.mxu0 0.0
  %670 = vmatprep.subr.mxu0 0.0
  %671 = vmatpush1.xpose.msra.mxu0 0.0
  %672 = vmatprep.subr.mxu0 0.0
  %673 = vmatpush1.xpose.msra.mxu0 0.0
  %674 = vmatprep.subr.mxu0 0.0
  %675 = vmatpush1.xpose.msra.mxu0 0.0
  %676 = vmatprep.subr.mxu0 0.0
  %677 = vmatpush1.xpose.msra.mxu0 0.0
  %678 = vmatprep.subr.mxu0 0.0
  %679 = vmatpush1.xpose.msra.mxu0 0.0
  %680 = vmatprep.subr.mxu0 0.0
  %681 = vmatpush1.xpose.msra.mxu0 0.0
  %682 = vmatprep.subr.mxu0 0.0
  %683 = vmatpush1.xpose.msra.mxu0 0.0
  %684 = vmatprep.subr.mxu0 0.0
  %685 = vmatpush1.xpose.msra.mxu0 0.0
  %686 = vmatprep.subr.mxu0 0.0
  %687 = vmatpush1.xpose.msra.mxu0 0.0
  %688 = vmatprep.subr.mxu0 0.0
  %689 = vmatpush1.xpose.msra.mxu0 0.0
  %690 = vmatprep.subr.mxu0 0.0
  %691 = vmatpush1.xpose.msra.mxu0 0.0
  %692 = vmatprep.subr.mxu0 0.0
  %693 = vmatpush1.xpose.msra.mxu0 0.0
  %694 = vmatprep.subr.mxu0 0.0
  %695 = vmatpush1.xpose.msra.mxu0 0.0
  %696 = vmatprep.subr.mxu0 0.0
  %697 = vmatpush1.xpose.msra.mxu0 0.0
  %698 = vmatprep.subr.mxu0 0.0
  %699 = vmatpush1.xpose.msra.mxu0 0.0
  %700 = vmatprep.mubr.f32.mxu0 0.0
  %701 = vmatmul.mubr.f32.gmra.mrb[0].mxu0 %v632
  %v702 = vpop.f32.mrb[0].mxu0
  %v703 = vadd.f32 0.0, %v702
  %v704 = vpop.f32.mrb[0].mxu0
  %705 = vdwg.mxu0
  %707 = vrot.lane.b32.xlu0 %v255, 120
  %v708 = vpop.permute.xlu0 %707
  %v709 = vsel %vm28, %v255, 0
  %v711 = vsel %vm28, %v708, 0
  %713 = vmatprep.subr.mxu0 0.0
  %714 = vmatpush1.xpose.msra.mxu0 %v711
  %715 = vmatprep.subr.mxu0 0.0
  %716 = vmatpush1.xpose.msra.mxu0 0.0
  %717 = vmatprep.subr.mxu0 0.0
  %718 = vmatpush1.xpose.msra.mxu0 0.0
  %719 = vmatprep.subr.mxu0 0.0
  %720 = vmatpush1.xpose.msra.mxu0 0.0
  %721 = vmatprep.subr.mxu0 0.0
  %722 = vmatpush1.xpose.msra.mxu0 0.0
  %723 = vmatprep.subr.mxu0 0.0
  %724 = vmatpush1.xpose.msra.mxu0 0.0
  %725 = vmatprep.subr.mxu0 0.0
  %726 = vmatpush1.xpose.msra.mxu0 0.0
  %727 = vmatprep.subr.mxu0 0.0
  %728 = vmatpush1.xpose.msra.mxu0 0.0
  %729 = vmatprep.subr.mxu0 0.0
  %730 = vmatpush1.xpose.msra.mxu0 0.0
  %731 = vmatprep.subr.mxu0 0.0
  %732 = vmatpush1.xpose.msra.mxu0 0.0
  %733 = vmatprep.subr.mxu0 0.0
  %734 = vmatpush1.xpose.msra.mxu0 0.0
  %735 = vmatprep.subr.mxu0 0.0
  %736 = vmatpush1.xpose.msra.mxu0 0.0
  %737 = vmatprep.subr.mxu0 0.0
  %738 = vmatpush1.xpose.msra.mxu0 0.0
  %739 = vmatprep.subr.mxu0 0.0
  %740 = vmatpush1.xpose.msra.mxu0 0.0
  %741 = vmatprep.subr.mxu0 0.0
  %742 = vmatpush1.xpose.msra.mxu0 0.0
  %743 = vmatprep.subr.mxu0 0.0
  %744 = vmatpush1.xpose.msra.mxu0 0.0
  %745 = vmatprep.subr.mxu0 0.0
  %746 = vmatpush1.xpose.msra.mxu0 0.0
  %747 = vmatprep.subr.mxu0 0.0
  %748 = vmatpush1.xpose.msra.mxu0 0.0
  %749 = vmatprep.subr.mxu0 0.0
  %750 = vmatpush1.xpose.msra.mxu0 0.0
  %751 = vmatprep.subr.mxu0 0.0
  %752 = vmatpush1.xpose.msra.mxu0 0.0
  %753 = vmatprep.subr.mxu0 0.0
  %754 = vmatpush1.xpose.msra.mxu0 0.0
  %755 = vmatprep.subr.mxu0 0.0
  %756 = vmatpush1.xpose.msra.mxu0 0.0
  %757 = vmatprep.subr.mxu0 0.0
  %758 = vmatpush1.xpose.msra.mxu0 0.0
  %759 = vmatprep.subr.mxu0 0.0
  %760 = vmatpush1.xpose.msra.mxu0 0.0
  %761 = vmatprep.subr.mxu0 0.0
  %762 = vmatpush1.xpose.msra.mxu0 0.0
  %763 = vmatprep.subr.mxu0 0.0
  %764 = vmatpush1.xpose.msra.mxu0 0.0
  %765 = vmatprep.subr.mxu0 0.0
  %766 = vmatpush1.xpose.msra.mxu0 0.0
  %767 = vmatprep.subr.mxu0 0.0
  %768 = vmatpush1.xpose.msra.mxu0 0.0
  %769 = vmatprep.subr.mxu0 0.0
  %770 = vmatpush1.xpose.msra.mxu0 0.0
  %771 = vmatprep.subr.mxu0 0.0
  %772 = vmatpush1.xpose.msra.mxu0 0.0
  %773 = vmatprep.subr.mxu0 0.0
  %774 = vmatpush1.xpose.msra.mxu0 0.0
  %775 = vmatprep.subr.mxu0 0.0
  %776 = vmatpush1.xpose.msra.mxu0 0.0
  %777 = vmatprep.mubr.f32.mxu0 0.0
  %778 = vmatmul.mubr.f32.gmra.mrb[0].mxu0 %v709
  %v779 = vpop.f32.mrb[0].mxu0
  %v780 = vadd.f32 0.0, %v779
  %v781 = vpop.f32.mrb[0].mxu0
  %782 = vdwg.mxu0
  %784 = vrot.lane.b32.xlu0 %v301, 120
  %v785 = vpop.permute.xlu0 %784
  %v786 = vsel %vm28, %v301, 0
  %v788 = vsel %vm28, %v785, 0
  %790 = vmatprep.subr.mxu0 0.0
  %791 = vmatpush1.xpose.msra.mxu0 %v788
  %792 = vmatprep.subr.mxu0 0.0
  %793 = vmatpush1.xpose.msra.mxu0 0.0
  %794 = vmatprep.subr.mxu0 0.0
  %795 = vmatpush1.xpose.msra.mxu0 0.0
  %796 = vmatprep.subr.mxu0 0.0
  %797 = vmatpush1.xpose.msra.mxu0 0.0
  %798 = vmatprep.subr.mxu0 0.0
  %799 = vmatpush1.xpose.msra.mxu0 0.0
  %800 = vmatprep.subr.mxu0 0.0
  %801 = vmatpush1.xpose.msra.mxu0 0.0
  %802 = vmatprep.subr.mxu0 0.0
  %803 = vmatpush1.xpose.msra.mxu0 0.0
  %804 = vmatprep.subr.mxu0 0.0
  %805 = vmatpush1.xpose.msra.mxu0 0.0
  %806 = vmatprep.subr.mxu0 0.0
  %807 = vmatpush1.xpose.msra.mxu0 0.0
  %808 = vmatprep.subr.mxu0 0.0
  %809 = vmatpush1.xpose.msra.mxu0 0.0
  %810 = vmatprep.subr.mxu0 0.0
  %811 = vmatpush1.xpose.msra.mxu0 0.0
  %812 = vmatprep.subr.mxu0 0.0
  %813 = vmatpush1.xpose.msra.mxu0 0.0
  %814 = vmatprep.subr.mxu0 0.0
  %815 = vmatpush1.xpose.msra.mxu0 0.0
  %816 = vmatprep.subr.mxu0 0.0
  %817 = vmatpush1.xpose.msra.mxu0 0.0
  %818 = vmatprep.subr.mxu0 0.0
  %819 = vmatpush1.xpose.msra.mxu0 0.0
  %820 = vmatprep.subr.mxu0 0.0
  %821 = vmatpush1.xpose.msra.mxu0 0.0
  %822 = vmatprep.subr.mxu0 0.0
  %823 = vmatpush1.xpose.msra.mxu0 0.0
  %824 = vmatprep.subr.mxu0 0.0
  %825 = vmatpush1.xpose.msra.mxu0 0.0
  %826 = vmatprep.subr.mxu0 0.0
  %827 = vmatpush1.xpose.msra.mxu0 0.0
  %828 = vmatprep.subr.mxu0 0.0
  %829 = vmatpush1.xpose.msra.mxu0 0.0
  %830 = vmatprep.subr.mxu0 0.0
  %831 = vmatpush1.xpose.msra.mxu0 0.0
  %832 = vmatprep.subr.mxu0 0.0
  %833 = vmatpush1.xpose.msra.mxu0 0.0
  %834 = vmatprep.subr.mxu0 0.0
  %835 = vmatpush1.xpose.msra.mxu0 0.0
  %836 = vmatprep.subr.mxu0 0.0
  %837 = vmatpush1.xpose.msra.mxu0 0.0
  %838 = vmatprep.subr.mxu0 0.0
  %839 = vmatpush1.xpose.msra.mxu0 0.0
  %840 = vmatprep.subr.mxu0 0.0
  %841 = vmatpush1.xpose.msra.mxu0 0.0
  %842 = vmatprep.subr.mxu0 0.0
  %843 = vmatpush1.xpose.msra.mxu0 0.0
  %844 = vmatprep.subr.mxu0 0.0
  %845 = vmatpush1.xpose.msra.mxu0 0.0
  %846 = vmatprep.subr.mxu0 0.0
  %847 = vmatpush1.xpose.msra.mxu0 0.0
  %848 = vmatprep.subr.mxu0 0.0
  %849 = vmatpush1.xpose.msra.mxu0 0.0
  %850 = vmatprep.subr.mxu0 0.0
  %851 = vmatpush1.xpose.msra.mxu0 0.0
  %852 = vmatprep.subr.mxu0 0.0
  %853 = vmatpush1.xpose.msra.mxu0 0.0
  %854 = vmatprep.mubr.f32.mxu0 0.0
  %855 = vmatmul.mubr.f32.gmra.mrb[0].mxu0 %v786
  %v856 = vpop.f32.mrb[0].mxu0
  %v857 = vadd.f32 0.0, %v856
  %v858 = vpop.f32.mrb[0].mxu0
  %859 = vdwg.mxu0
  %861 = vrot.lane.b32.xlu0 %v347, 120
  %v862 = vpop.permute.xlu0 %861
  %v863 = vsel %vm28, %v347, 0
  %v865 = vsel %vm28, %v862, 0
  %867 = vmatprep.subr.mxu0 0.0
  %868 = vmatpush1.xpose.msra.mxu0 %v865
  %869 = vmatprep.subr.mxu0 0.0
  %870 = vmatpush1.xpose.msra.mxu0 0.0
  %871 = vmatprep.subr.mxu0 0.0
  %872 = vmatpush1.xpose.msra.mxu0 0.0
  %873 = vmatprep.subr.mxu0 0.0
  %874 = vmatpush1.xpose.msra.mxu0 0.0
  %875 = vmatprep.subr.mxu0 0.0
  %876 = vmatpush1.xpose.msra.mxu0 0.0
  %877 = vmatprep.subr.mxu0 0.0
  %878 = vmatpush1.xpose.msra.mxu0 0.0
  %879 = vmatprep.subr.mxu0 0.0
  %880 = vmatpush1.xpose.msra.mxu0 0.0
  %881 = vmatprep.subr.mxu0 0.0
  %882 = vmatpush1.xpose.msra.mxu0 0.0
  %883 = vmatprep.subr.mxu0 0.0
  %884 = vmatpush1.xpose.msra.mxu0 0.0
  %885 = vmatprep.subr.mxu0 0.0
  %886 = vmatpush1.xpose.msra.mxu0 0.0
  %887 = vmatprep.subr.mxu0 0.0
  %888 = vmatpush1.xpose.msra.mxu0 0.0
  %889 = vmatprep.subr.mxu0 0.0
  %890 = vmatpush1.xpose.msra.mxu0 0.0
  %891 = vmatprep.subr.mxu0 0.0
  %892 = vmatpush1.xpose.msra.mxu0 0.0
  %893 = vmatprep.subr.mxu0 0.0
  %894 = vmatpush1.xpose.msra.mxu0 0.0
  %895 = vmatprep.subr.mxu0 0.0
  %896 = vmatpush1.xpose.msra.mxu0 0.0
  %897 = vmatprep.subr.mxu0 0.0
  %898 = vmatpush1.xpose.msra.mxu0 0.0
  %899 = vmatprep.subr.mxu0 0.0
  %900 = vmatpush1.xpose.msra.mxu0 0.0
  %901 = vmatprep.subr.mxu0 0.0
  %902 = vmatpush1.xpose.msra.mxu0 0.0
  %903 = vmatprep.subr.mxu0 0.0
  %904 = vmatpush1.xpose.msra.mxu0 0.0
  %905 = vmatprep.subr.mxu0 0.0
  %906 = vmatpush1.xpose.msra.mxu0 0.0
  %907 = vmatprep.subr.mxu0 0.0
  %908 = vmatpush1.xpose.msra.mxu0 0.0
  %909 = vmatprep.subr.mxu0 0.0
  %910 = vmatpush1.xpose.msra.mxu0 0.0
  %911 = vmatprep.subr.mxu0 0.0
  %912 = vmatpush1.xpose.msra.mxu0 0.0
  %913 = vmatprep.subr.mxu0 0.0
  %914 = vmatpush1.xpose.msra.mxu0 0.0
  %915 = vmatprep.subr.mxu0 0.0
  %916 = vmatpush1.xpose.msra.mxu0 0.0
  %917 = vmatprep.subr.mxu0 0.0
  %918 = vmatpush1.xpose.msra.mxu0 0.0
  %919 = vmatprep.subr.mxu0 0.0
  %920 = vmatpush1.xpose.msra.mxu0 0.0
  %921 = vmatprep.subr.mxu0 0.0
  %922 = vmatpush1.xpose.msra.mxu0 0.0
  %923 = vmatprep.subr.mxu0 0.0
  %924 = vmatpush1.xpose.msra.mxu0 0.0
  %925 = vmatprep.subr.mxu0 0.0
  %926 = vmatpush1.xpose.msra.mxu0 0.0
  %927 = vmatprep.subr.mxu0 0.0
  %928 = vmatpush1.xpose.msra.mxu0 0.0
  %929 = vmatprep.subr.mxu0 0.0
  %930 = vmatpush1.xpose.msra.mxu0 0.0
  %931 = vmatprep.mubr.f32.mxu0 0.0
  %932 = vmatmul.mubr.f32.gmra.mrb[0].mxu0 %v863
  %v933 = vpop.f32.mrb[0].mxu0
  %v934 = vadd.f32 0.0, %v933
  %v935 = vpop.f32.mrb[0].mxu0
  %936 = vdwg.mxu0
  %938 = vrot.lane.b32.xlu0 %v393, 120
  %v939 = vpop.permute.xlu0 %938
  %v940 = vsel %vm28, %v393, 0
  %v942 = vsel %vm28, %v939, 0
  %944 = vmatprep.subr.mxu0 0.0
  %945 = vmatpush1.xpose.msra.mxu0 %v942
  %946 = vmatprep.subr.mxu0 0.0
  %947 = vmatpush1.xpose.msra.mxu0 0.0
  %948 = vmatprep.subr.mxu0 0.0
  %949 = vmatpush1.xpose.msra.mxu0 0.0
  %950 = vmatprep.subr.mxu0 0.0
  %951 = vmatpush1.xpose.msra.mxu0 0.0
  %952 = vmatprep.subr.mxu0 0.0
  %953 = vmatpush1.xpose.msra.mxu0 0.0
  %954 = vmatprep.subr.mxu0 0.0
  %955 = vmatpush1.xpose.msra.mxu0 0.0
  %956 = vmatprep.subr.mxu0 0.0
  %957 = vmatpush1.xpose.msra.mxu0 0.0
  %958 = vmatprep.subr.mxu0 0.0
  %959 = vmatpush1.xpose.msra.mxu0 0.0
  %960 = vmatprep.subr.mxu0 0.0
  %961 = vmatpush1.xpose.msra.mxu0 0.0
  %962 = vmatprep.subr.mxu0 0.0
  %963 = vmatpush1.xpose.msra.mxu0 0.0
  %964 = vmatprep.subr.mxu0 0.0
  %965 = vmatpush1.xpose.msra.mxu0 0.0
  %966 = vmatprep.subr.mxu0 0.0
  %967 = vmatpush1.xpose.msra.mxu0 0.0
  %968 = vmatprep.subr.mxu0 0.0
  %969 = vmatpush1.xpose.msra.mxu0 0.0
  %970 = vmatprep.subr.mxu0 0.0
  %971 = vmatpush1.xpose.msra.mxu0 0.0
  %972 = vmatprep.subr.mxu0 0.0
  %973 = vmatpush1.xpose.msra.mxu0 0.0
  %974 = vmatprep.subr.mxu0 0.0
  %975 = vmatpush1.xpose.msra.mxu0 0.0
  %976 = vmatprep.subr.mxu0 0.0
  %977 = vmatpush1.xpose.msra.mxu0 0.0
  %978 = vmatprep.subr.mxu0 0.0
  %979 = vmatpush1.xpose.msra.mxu0 0.0
  %980 = vmatprep.subr.mxu0 0.0
  %981 = vmatpush1.xpose.msra.mxu0 0.0
  %982 = vmatprep.subr.mxu0 0.0
  %983 = vmatpush1.xpose.msra.mxu0 0.0
  %984 = vmatprep.subr.mxu0 0.0
  %985 = vmatpush1.xpose.msra.mxu0 0.0
  %986 = vmatprep.subr.mxu0 0.0
  %987 = vmatpush1.xpose.msra.mxu0 0.0
  %988 = vmatprep.subr.mxu0 0.0
  %989 = vmatpush1.xpose.msra.mxu0 0.0
  %990 = vmatprep.subr.mxu0 0.0
  %991 = vmatpush1.xpose.msra.mxu0 0.0
  %992 = vmatprep.subr.mxu0 0.0
  %993 = vmatpush1.xpose.msra.mxu0 0.0
  %994 = vmatprep.subr.mxu0 0.0
  %995 = vmatpush1.xpose.msra.mxu0 0.0
  %996 = vmatprep.subr.mxu0 0.0
  %997 = vmatpush1.xpose.msra.mxu0 0.0
  %998 = vmatprep.subr.mxu0 0.0
  %999 = vmatpush1.xpose.msra.mxu0 0.0
  %1000 = vmatprep.subr.mxu0 0.0
  %1001 = vmatpush1.xpose.msra.mxu0 0.0
  %1002 = vmatprep.subr.mxu0 0.0
  %1003 = vmatpush1.xpose.msra.mxu0 0.0
  %1004 = vmatprep.subr.mxu0 0.0
  %1005 = vmatpush1.xpose.msra.mxu0 0.0
  %1006 = vmatprep.subr.mxu0 0.0
  %1007 = vmatpush1.xpose.msra.mxu0 0.0
  %1008 = vmatprep.mubr.f32.mxu0 0.0
  %1009 = vmatmul.mubr.f32.gmra.mrb[0].mxu0 %v940
  %v1010 = vpop.f32.mrb[0].mxu0
  %v1011 = vadd.f32 0.0, %v1010
  %v1012 = vpop.f32.mrb[0].mxu0
  %1013 = vdwg.mxu0
  %v1014 = vsel %vm28, %v472, -inf
  %1015 = vmax.xlane.f32.xlu0 %v1014
  %v1016 = vpop.xlane.xlu0 %1015
  %v1017 = vsel %vm28, %v549, -inf
  %1018 = vmax.xlane.f32.xlu0 %v1017
  %v1019 = vpop.xlane.xlu0 %1018
  %v1020 = vsel %vm28, %v626, -inf
  %1021 = vmax.xlane.f32.xlu0 %v1020
  %v1022 = vpop.xlane.xlu0 %1021
  %v1023 = vsel %vm28, %v703, -inf
  %1024 = vmax.xlane.f32.xlu0 %v1023
  %v1025 = vpop.xlane.xlu0 %1024
  %v1026 = vsel %vm28, %v780, -inf
  %1027 = vmax.xlane.f32.xlu0 %v1026
  %v1028 = vpop.xlane.xlu0 %1027
  %v1029 = vsel %vm28, %v857, -inf
  %1030 = vmax.xlane.f32.xlu0 %v1029
  %v1031 = vpop.xlane.xlu0 %1030
  %v1032 = vsel %vm28, %v934, -inf
  %1033 = vmax.xlane.f32.xlu0 %v1032
  %v1034 = vpop.xlane.xlu0 %1033
  %v1035 = vsel %vm28, %v1011, -inf
  %1036 = vmax.xlane.f32.xlu0 %v1035
  %v1037 = vpop.xlane.xlu0 %1036
  %v1038 = vsub.f32 %v472, %v1016
  %v1039 = vsub.f32 %v549, %v1019
  %v1040 = vsub.f32 %v626, %v1022
  %v1041 = vsub.f32 %v703, %v1025
  %v1042 = vsub.f32 %v780, %v1028
  %v1043 = vsub.f32 %v857, %v1031
  %v1044 = vsub.f32 %v934, %v1034
  %v1045 = vsub.f32 %v1011, %v1037
  %v1046 = vmul.f32 %v1038, 1.442695
  %v1047 = vpow.pop %v1046
  %v1048 = vmul.f32 %v1039, 1.442695
  %v1049 = vpow.pop %v1048
  %v1050 = vmul.f32 %v1040, 1.442695
  %v1051 = vpow.pop %v1050
  %v1052 = vmul.f32 %v1041, 1.442695
  %v1053 = vpow.pop %v1052
  %v1054 = vmul.f32 %v1042, 1.442695
  %v1055 = vpow.pop %v1054
  %v1056 = vmul.f32 %v1043, 1.442695
  %v1057 = vpow.pop %v1056
  %v1058 = vmul.f32 %v1044, 1.442695
  %v1059 = vpow.pop %v1058
  %v1060 = vmul.f32 %v1045, 1.442695
  %v1061 = vpow.pop %v1060
  %v1062 = vsel %vm28, %v1047, 0.0
  %1063 = vadd.xlane.f32.xlu0 %v1062
  %v1064 = vpop.xlane.xlu0 %1063
  %v1065 = vsel %vm28, %v1049, 0.0
  %1066 = vadd.xlane.f32.xlu0 %v1065
  %v1067 = vpop.xlane.xlu0 %1066
  %v1068 = vsel %vm28, %v1051, 0.0
  %1069 = vadd.xlane.f32.xlu0 %v1068
  %v1070 = vpop.xlane.xlu0 %1069
  %v1071 = vsel %vm28, %v1053, 0.0
  %1072 = vadd.xlane.f32.xlu0 %v1071
  %v1073 = vpop.xlane.xlu0 %1072
  %v1074 = vsel %vm28, %v1055, 0.0
  %1075 = vadd.xlane.f32.xlu0 %v1074
  %v1076 = vpop.xlane.xlu0 %1075
  %v1077 = vsel %vm28, %v1057, 0.0
  %1078 = vadd.xlane.f32.xlu0 %v1077
  %v1079 = vpop.xlane.xlu0 %1078
  %v1080 = vsel %vm28, %v1059, 0.0
  %1081 = vadd.xlane.f32.xlu0 %v1080
  %v1082 = vpop.xlane.xlu0 %1081
  %v1083 = vsel %vm28, %v1061, 0.0
  %1084 = vadd.xlane.f32.xlu0 %v1083
  %v1085 = vpop.xlane.xlu0 %1084
  %v1086 = vrcp.pop %v1064
  %v1087 = vrcp.pop %v1067
  %v1088 = vrcp.pop %v1070
  %v1089 = vrcp.pop %v1073
  %v1090 = vrcp.pop %v1076
  %v1091 = vrcp.pop %v1079
  %v1092 = vrcp.pop %v1082
  %v1093 = vrcp.pop %v1085
  %v1094 = vmul.f32 %v1047, %v1086
  %v1095 = vmul.f32 %v1049, %v1087
  %v1096 = vmul.f32 %v1051, %v1088
  %v1097 = vmul.f32 %v1053, %v1089
  %v1098 = vmul.f32 %v1055, %v1090
  %v1099 = vmul.f32 %v1057, %v1091
  %v1100 = vmul.f32 %v1059, %v1092
  %v1101 = vmul.f32 %v1061, %v1093
  %1102 = vrot.lane.b32.xlu0 %v71, 112
  %v1103 = vpop.permute.xlu0 %1102
  %v1106 = vsel %vm28, %v1094, 0
  %1108 = vmatprep.subr.mxu0 0.0
  %1109 = vmatpush1.msra.mxu0 %v1103
  %1110 = vmatprep.subr.mxu0 0.0
  %1111 = vmatpush1.msra.mxu0 0.0
  %1112 = vmatprep.subr.mxu0 0.0
  %1113 = vmatpush1.msra.mxu0 0.0
  %1114 = vmatprep.subr.mxu0 0.0
  %1115 = vmatpush1.msra.mxu0 0.0
  %1116 = vmatprep.subr.mxu0 0.0
  %1117 = vmatpush1.msra.mxu0 0.0
  %1118 = vmatprep.subr.mxu0 0.0
  %1119 = vmatpush1.msra.mxu0 0.0
  %1120 = vmatprep.subr.mxu0 0.0
  %1121 = vmatpush1.msra.mxu0 0.0
  %1122 = vmatprep.subr.mxu0 0.0
  %1123 = vmatpush1.msra.mxu0 0.0
  %1124 = vmatprep.subr.mxu0 0.0
  %1125 = vmatpush1.msra.mxu0 0.0
  %1126 = vmatprep.subr.mxu0 0.0
  %1127 = vmatpush1.msra.mxu0 0.0
  %1128 = vmatprep.subr.mxu0 0.0
  %1129 = vmatpush1.msra.mxu0 0.0
  %1130 = vmatprep.subr.mxu0 0.0
  %1131 = vmatpush1.msra.mxu0 0.0
  %1132 = vmatprep.subr.mxu0 0.0
  %1133 = vmatpush1.msra.mxu0 0.0
  %1134 = vmatprep.subr.mxu0 0.0
  %1135 = vmatpush1.msra.mxu0 0.0
  %1136 = vmatprep.subr.mxu0 0.0
  %1137 = vmatpush1.msra.mxu0 0.0
  %1138 = vmatprep.subr.mxu0 0.0
  %1139 = vmatpush1.msra.mxu0 0.0
  %1140 = vmatprep.subr.mxu0 0.0
  %1141 = vmatpush1.msra.mxu0 0.0
  %1142 = vmatprep.subr.mxu0 0.0
  %1143 = vmatpush1.msra.mxu0 0.0
  %1144 = vmatprep.subr.mxu0 0.0
  %1145 = vmatpush1.msra.mxu0 0.0
  %1146 = vmatprep.subr.mxu0 0.0
  %1147 = vmatpush1.msra.mxu0 0.0
  %1148 = vmatprep.subr.mxu0 0.0
  %1149 = vmatpush1.msra.mxu0 0.0
  %1150 = vmatprep.subr.mxu0 0.0
  %1151 = vmatpush1.msra.mxu0 0.0
  %1152 = vmatprep.subr.mxu0 0.0
  %1153 = vmatpush1.msra.mxu0 0.0
  %1154 = vmatprep.subr.mxu0 0.0
  %1155 = vmatpush1.msra.mxu0 0.0
  %1156 = vmatprep.subr.mxu0 0.0
  %1157 = vmatpush1.msra.mxu0 0.0
  %1158 = vmatprep.subr.mxu0 0.0
  %1159 = vmatpush1.msra.mxu0 0.0
  %1160 = vmatprep.subr.mxu0 0.0
  %1161 = vmatpush1.msra.mxu0 0.0
  %1162 = vmatprep.subr.mxu0 0.0
  %1163 = vmatpush1.msra.mxu0 0.0
  %1164 = vmatprep.subr.mxu0 0.0
  %1165 = vmatpush1.msra.mxu0 0.0
  %1166 = vmatprep.subr.mxu0 0.0
  %1167 = vmatpush1.msra.mxu0 0.0
  %1168 = vmatprep.subr.mxu0 0.0
  %1169 = vmatpush1.msra.mxu0 0.0
  %1170 = vmatprep.subr.mxu0 0.0
  %1171 = vmatpush1.msra.mxu0 0.0
  %1172 = vmatprep.mubr.f32.mxu0 0.0
  %1173 = vmatmul.mubr.f32.gmra.mrb[0].mxu0 %v1106
  %v1174 = vpop.f32.mrb[0].mxu0
  %v1175 = vadd.f32 0.0, %v1174
  %v1176 = vpop.f32.mrb[0].mxu0
  %1177 = vdwg.mxu0
  %1178 = vrot.lane.b32.xlu0 %v117, 112
  %v1179 = vpop.permute.xlu0 %1178
  %v1182 = vsel %vm28, %v1095, 0
  %1184 = vmatprep.subr.mxu0 0.0
  %1185 = vmatpush1.msra.mxu0 %v1179
  %1186 = vmatprep.subr.mxu0 0.0
  %1187 = vmatpush1.msra.mxu0 0.0
  %1188 = vmatprep.subr.mxu0 0.0
  %1189 = vmatpush1.msra.mxu0 0.0
  %1190 = vmatprep.subr.mxu0 0.0
  %1191 = vmatpush1.msra.mxu0 0.0
  %1192 = vmatprep.subr.mxu0 0.0
  %1193 = vmatpush1.msra.mxu0 0.0
  %1194 = vmatprep.subr.mxu0 0.0
  %1195 = vmatpush1.msra.mxu0 0.0
  %1196 = vmatprep.subr.mxu0 0.0
  %1197 = vmatpush1.msra.mxu0 0.0
  %1198 = vmatprep.subr.mxu0 0.0
  %1199 = vmatpush1.msra.mxu0 0.0
  %1200 = vmatprep.subr.mxu0 0.0
  %1201 = vmatpush1.msra.mxu0 0.0
  %1202 = vmatprep.subr.mxu0 0.0
  %1203 = vmatpush1.msra.mxu0 0.0
  %1204 = vmatprep.subr.mxu0 0.0
  %1205 = vmatpush1.msra.mxu0 0.0
  %1206 = vmatprep.subr.mxu0 0.0
  %1207 = vmatpush1.msra.mxu0 0.0
  %1208 = vmatprep.subr.mxu0 0.0
  %1209 = vmatpush1.msra.mxu0 0.0
  %1210 = vmatprep.subr.mxu0 0.0
  %1211 = vmatpush1.msra.mxu0 0.0
  %1212 = vmatprep.subr.mxu0 0.0
  %1213 = vmatpush1.msra.mxu0 0.0
  %1214 = vmatprep.subr.mxu0 0.0
  %1215 = vmatpush1.msra.mxu0 0.0
  %1216 = vmatprep.subr.mxu0 0.0
  %1217 = vmatpush1.msra.mxu0 0.0
  %1218 = vmatprep.subr.mxu0 0.0
  %1219 = vmatpush1.msra.mxu0 0.0
  %1220 = vmatprep.subr.mxu0 0.0
  %1221 = vmatpush1.msra.mxu0 0.0
  %1222 = vmatprep.subr.mxu0 0.0
  %1223 = vmatpush1.msra.mxu0 0.0
  %1224 = vmatprep.subr.mxu0 0.0
  %1225 = vmatpush1.msra.mxu0 0.0
  %1226 = vmatprep.subr.mxu0 0.0
  %1227 = vmatpush1.msra.mxu0 0.0
  %1228 = vmatprep.subr.mxu0 0.0
  %1229 = vmatpush1.msra.mxu0 0.0
  %1230 = vmatprep.subr.mxu0 0.0
  %1231 = vmatpush1.msra.mxu0 0.0
  %1232 = vmatprep.subr.mxu0 0.0
  %1233 = vmatpush1.msra.mxu0 0.0
  %1234 = vmatprep.subr.mxu0 0.0
  %1235 = vmatpush1.msra.mxu0 0.0
  %1236 = vmatprep.subr.mxu0 0.0
  %1237 = vmatpush1.msra.mxu0 0.0
  %1238 = vmatprep.subr.mxu0 0.0
  %1239 = vmatpush1.msra.mxu0 0.0
  %1240 = vmatprep.subr.mxu0 0.0
  %1241 = vmatpush1.msra.mxu0 0.0
  %1242 = vmatprep.subr.mxu0 0.0
  %1243 = vmatpush1.msra.mxu0 0.0
  %1244 = vmatprep.subr.mxu0 0.0
  %1245 = vmatpush1.msra.mxu0 0.0
  %1246 = vmatprep.subr.mxu0 0.0
  %1247 = vmatpush1.msra.mxu0 0.0
  %1248 = vmatprep.mubr.f32.mxu0 0.0
  %1249 = vmatmul.mubr.f32.gmra.mrb[0].mxu0 %v1182
  %v1250 = vpop.f32.mrb[0].mxu0
  %v1251 = vadd.f32 0.0, %v1250
  %v1252 = vpop.f32.mrb[0].mxu0
  %1253 = vdwg.mxu0
  %1254 = vrot.lane.b32.xlu0 %v163, 112
  %v1255 = vpop.permute.xlu0 %1254
  %v1258 = vsel %vm28, %v1096, 0
  %1260 = vmatprep.subr.mxu0 0.0
  %1261 = vmatpush1.msra.mxu0 %v1255
  %1262 = vmatprep.subr.mxu0 0.0
  %1263 = vmatpush1.msra.mxu0 0.0
  %1264 = vmatprep.subr.mxu0 0.0
  %1265 = vmatpush1.msra.mxu0 0.0
  %1266 = vmatprep.subr.mxu0 0.0
  %1267 = vmatpush1.msra.mxu0 0.0
  %1268 = vmatprep.subr.mxu0 0.0
  %1269 = vmatpush1.msra.mxu0 0.0
  %1270 = vmatprep.subr.mxu0 0.0
  %1271 = vmatpush1.msra.mxu0 0.0
  %1272 = vmatprep.subr.mxu0 0.0
  %1273 = vmatpush1.msra.mxu0 0.0
  %1274 = vmatprep.subr.mxu0 0.0
  %1275 = vmatpush1.msra.mxu0 0.0
  %1276 = vmatprep.subr.mxu0 0.0
  %1277 = vmatpush1.msra.mxu0 0.0
  %1278 = vmatprep.subr.mxu0 0.0
  %1279 = vmatpush1.msra.mxu0 0.0
  %1280 = vmatprep.subr.mxu0 0.0
  %1281 = vmatpush1.msra.mxu0 0.0
  %1282 = vmatprep.subr.mxu0 0.0
  %1283 = vmatpush1.msra.mxu0 0.0
  %1284 = vmatprep.subr.mxu0 0.0
  %1285 = vmatpush1.msra.mxu0 0.0
  %1286 = vmatprep.subr.mxu0 0.0
  %1287 = vmatpush1.msra.mxu0 0.0
  %1288 = vmatprep.subr.mxu0 0.0
  %1289 = vmatpush1.msra.mxu0 0.0
  %1290 = vmatprep.subr.mxu0 0.0
  %1291 = vmatpush1.msra.mxu0 0.0
  %1292 = vmatprep.subr.mxu0 0.0
  %1293 = vmatpush1.msra.mxu0 0.0
  %1294 = vmatprep.subr.mxu0 0.0
  %1295 = vmatpush1.msra.mxu0 0.0
  %1296 = vmatprep.subr.mxu0 0.0
  %1297 = vmatpush1.msra.mxu0 0.0
  %1298 = vmatprep.subr.mxu0 0.0
  %1299 = vmatpush1.msra.mxu0 0.0
  %1300 = vmatprep.subr.mxu0 0.0
  %1301 = vmatpush1.msra.mxu0 0.0
  %1302 = vmatprep.subr.mxu0 0.0
  %1303 = vmatpush1.msra.mxu0 0.0
  %1304 = vmatprep.subr.mxu0 0.0
  %1305 = vmatpush1.msra.mxu0 0.0
  %1306 = vmatprep.subr.mxu0 0.0
  %1307 = vmatpush1.msra.mxu0 0.0
  %1308 = vmatprep.subr.mxu0 0.0
  %1309 = vmatpush1.msra.mxu0 0.0
  %1310 = vmatprep.subr.mxu0 0.0
  %1311 = vmatpush1.msra.mxu0 0.0
  %1312 = vmatprep.subr.mxu0 0.0
  %1313 = vmatpush1.msra.mxu0 0.0
  %1314 = vmatprep.subr.mxu0 0.0
  %1315 = vmatpush1.msra.mxu0 0.0
  %1316 = vmatprep.subr.mxu0 0.0
  %1317 = vmatpush1.msra.mxu0 0.0
  %1318 = vmatprep.subr.mxu0 0.0
  %1319 = vmatpush1.msra.mxu0 0.0
  %1320 = vmatprep.subr.mxu0 0.0
  %1321 = vmatpush1.msra.mxu0 0.0
  %1322 = vmatprep.subr.mxu0 0.0
  %1323 = vmatpush1.msra.mxu0 0.0
  %1324 = vmatprep.mubr.f32.mxu0 0.0
  %1325 = vmatmul.mubr.f32.gmra.mrb[0].mxu0 %v1258
  %v1326 = vpop.f32.mrb[0].mxu0
  %v1327 = vadd.f32 0.0, %v1326
  %v1328 = vpop.f32.mrb[0].mxu0
  %1329 = vdwg.mxu0
  %1330 = vrot.lane.b32.xlu0 %v209, 112
  %v1331 = vpop.permute.xlu0 %1330
  %v1334 = vsel %vm28, %v1097, 0
  %1336 = vmatprep.subr.mxu0 0.0
  %1337 = vmatpush1.msra.mxu0 %v1331
  %1338 = vmatprep.subr.mxu0 0.0
  %1339 = vmatpush1.msra.mxu0 0.0
  %1340 = vmatprep.subr.mxu0 0.0
  %1341 = vmatpush1.msra.mxu0 0.0
  %1342 = vmatprep.subr.mxu0 0.0
  %1343 = vmatpush1.msra.mxu0 0.0
  %1344 = vmatprep.subr.mxu0 0.0
  %1345 = vmatpush1.msra.mxu0 0.0
  %1346 = vmatprep.subr.mxu0 0.0
  %1347 = vmatpush1.msra.mxu0 0.0
  %1348 = vmatprep.subr.mxu0 0.0
  %1349 = vmatpush1.msra.mxu0 0.0
  %1350 = vmatprep.subr.mxu0 0.0
  %1351 = vmatpush1.msra.mxu0 0.0
  %1352 = vmatprep.subr.mxu0 0.0
  %1353 = vmatpush1.msra.mxu0 0.0
  %1354 = vmatprep.subr.mxu0 0.0
  %1355 = vmatpush1.msra.mxu0 0.0
  %1356 = vmatprep.subr.mxu0 0.0
  %1357 = vmatpush1.msra.mxu0 0.0
  %1358 = vmatprep.subr.mxu0 0.0
  %1359 = vmatpush1.msra.mxu0 0.0
  %1360 = vmatprep.subr.mxu0 0.0
  %1361 = vmatpush1.msra.mxu0 0.0
  %1362 = vmatprep.subr.mxu0 0.0
  %1363 = vmatpush1.msra.mxu0 0.0
  %1364 = vmatprep.subr.mxu0 0.0
  %1365 = vmatpush1.msra.mxu0 0.0
  %1366 = vmatprep.subr.mxu0 0.0
  %1367 = vmatpush1.msra.mxu0 0.0
  %1368 = vmatprep.subr.mxu0 0.0
  %1369 = vmatpush1.msra.mxu0 0.0
  %1370 = vmatprep.subr.mxu0 0.0
  %1371 = vmatpush1.msra.mxu0 0.0
  %1372 = vmatprep.subr.mxu0 0.0
  %1373 = vmatpush1.msra.mxu0 0.0
  %1374 = vmatprep.subr.mxu0 0.0
  %1375 = vmatpush1.msra.mxu0 0.0
  %1376 = vmatprep.subr.mxu0 0.0
  %1377 = vmatpush1.msra.mxu0 0.0
  %1378 = vmatprep.subr.mxu0 0.0
  %1379 = vmatpush1.msra.mxu0 0.0
  %1380 = vmatprep.subr.mxu0 0.0
  %1381 = vmatpush1.msra.mxu0 0.0
  %1382 = vmatprep.subr.mxu0 0.0
  %1383 = vmatpush1.msra.mxu0 0.0
  %1384 = vmatprep.subr.mxu0 0.0
  %1385 = vmatpush1.msra.mxu0 0.0
  %1386 = vmatprep.subr.mxu0 0.0
  %1387 = vmatpush1.msra.mxu0 0.0
  %1388 = vmatprep.subr.mxu0 0.0
  %1389 = vmatpush1.msra.mxu0 0.0
  %1390 = vmatprep.subr.mxu0 0.0
  %1391 = vmatpush1.msra.mxu0 0.0
  %1392 = vmatprep.subr.mxu0 0.0
  %1393 = vmatpush1.msra.mxu0 0.0
  %1394 = vmatprep.subr.mxu0 0.0
  %1395 = vmatpush1.msra.mxu0 0.0
  %1396 = vmatprep.subr.mxu0 0.0
  %1397 = vmatpush1.msra.mxu0 0.0
  %1398 = vmatprep.subr.mxu0 0.0
  %1399 = vmatpush1.msra.mxu0 0.0
  %1400 = vmatprep.mubr.f32.mxu0 0.0
  %1401 = vmatmul.mubr.f32.gmra.mrb[0].mxu0 %v1334
  %v1402 = vpop.f32.mrb[0].mxu0
  %v1403 = vadd.f32 0.0, %v1402
  %v1404 = vpop.f32.mrb[0].mxu0
  %1405 = vdwg.mxu0
  %1406 = vrot.lane.b32.xlu0 %v255, 112
  %v1407 = vpop.permute.xlu0 %1406
  %v1410 = vsel %vm28, %v1098, 0
  %1412 = vmatprep.subr.mxu0 0.0
  %1413 = vmatpush1.msra.mxu0 %v1407
  %1414 = vmatprep.subr.mxu0 0.0
  %1415 = vmatpush1.msra.mxu0 0.0
  %1416 = vmatprep.subr.mxu0 0.0
  %1417 = vmatpush1.msra.mxu0 0.0
  %1418 = vmatprep.subr.mxu0 0.0
  %1419 = vmatpush1.msra.mxu0 0.0
  %1420 = vmatprep.subr.mxu0 0.0
  %1421 = vmatpush1.msra.mxu0 0.0
  %1422 = vmatprep.subr.mxu0 0.0
  %1423 = vmatpush1.msra.mxu0 0.0
  %1424 = vmatprep.subr.mxu0 0.0
  %1425 = vmatpush1.msra.mxu0 0.0
  %1426 = vmatprep.subr.mxu0 0.0
  %1427 = vmatpush1.msra.mxu0 0.0
  %1428 = vmatprep.subr.mxu0 0.0
  %1429 = vmatpush1.msra.mxu0 0.0
  %1430 = vmatprep.subr.mxu0 0.0
  %1431 = vmatpush1.msra.mxu0 0.0
  %1432 = vmatprep.subr.mxu0 0.0
  %1433 = vmatpush1.msra.mxu0 0.0
  %1434 = vmatprep.subr.mxu0 0.0
  %1435 = vmatpush1.msra.mxu0 0.0
  %1436 = vmatprep.subr.mxu0 0.0
  %1437 = vmatpush1.msra.mxu0 0.0
  %1438 = vmatprep.subr.mxu0 0.0
  %1439 = vmatpush1.msra.mxu0 0.0
  %1440 = vmatprep.subr.mxu0 0.0
  %1441 = vmatpush1.msra.mxu0 0.0
  %1442 = vmatprep.subr.mxu0 0.0
  %1443 = vmatpush1.msra.mxu0 0.0
  %1444 = vmatprep.subr.mxu0 0.0
  %1445 = vmatpush1.msra.mxu0 0.0
  %1446 = vmatprep.subr.mxu0 0.0
  %1447 = vmatpush1.msra.mxu0 0.0
  %1448 = vmatprep.subr.mxu0 0.0
  %1449 = vmatpush1.msra.mxu0 0.0
  %1450 = vmatprep.subr.mxu0 0.0
  %1451 = vmatpush1.msra.mxu0 0.0
  %1452 = vmatprep.subr.mxu0 0.0
  %1453 = vmatpush1.msra.mxu0 0.0
  %1454 = vmatprep.subr.mxu0 0.0
  %1455 = vmatpush1.msra.mxu0 0.0
  %1456 = vmatprep.subr.mxu0 0.0
  %1457 = vmatpush1.msra.mxu0 0.0
  %1458 = vmatprep.subr.mxu0 0.0
  %1459 = vmatpush1.msra.mxu0 0.0
  %1460 = vmatprep.subr.mxu0 0.0
  %1461 = vmatpush1.msra.mxu0 0.0
  %1462 = vmatprep.subr.mxu0 0.0
  %1463 = vmatpush1.msra.mxu0 0.0
  %1464 = vmatprep.subr.mxu0 0.0
  %1465 = vmatpush1.msra.mxu0 0.0
  %1466 = vmatprep.subr.mxu0 0.0
  %1467 = vmatpush1.msra.mxu0 0.0
  %1468 = vmatprep.subr.mxu0 0.0
  %1469 = vmatpush1.msra.mxu0 0.0
  %1470 = vmatprep.subr.mxu0 0.0
  %1471 = vmatpush1.msra.mxu0 0.0
  %1472 = vmatprep.subr.mxu0 0.0
  %1473 = vmatpush1.msra.mxu0 0.0
  %1474 = vmatprep.subr.mxu0 0.0
  %1475 = vmatpush1.msra.mxu0 0.0
  %1476 = vmatprep.mubr.f32.mxu0 0.0
  %1477 = vmatmul.mubr.f32.gmra.mrb[0].mxu0 %v1410
  %v1478 = vpop.f32.mrb[0].mxu0
  %v1479 = vadd.f32 0.0, %v1478
  %v1480 = vpop.f32.mrb[0].mxu0
  %1481 = vdwg.mxu0
  %1482 = vrot.lane.b32.xlu0 %v301, 112
  %v1483 = vpop.permute.xlu0 %1482
  %v1486 = vsel %vm28, %v1099, 0
  %1488 = vmatprep.subr.mxu0 0.0
  %1489 = vmatpush1.msra.mxu0 %v1483
  %1490 = vmatprep.subr.mxu0 0.0
  %1491 = vmatpush1.msra.mxu0 0.0
  %1492 = vmatprep.subr.mxu0 0.0
  %1493 = vmatpush1.msra.mxu0 0.0
  %1494 = vmatprep.subr.mxu0 0.0
  %1495 = vmatpush1.msra.mxu0 0.0
  %1496 = vmatprep.subr.mxu0 0.0
  %1497 = vmatpush1.msra.mxu0 0.0
  %1498 = vmatprep.subr.mxu0 0.0
  %1499 = vmatpush1.msra.mxu0 0.0
  %1500 = vmatprep.subr.mxu0 0.0
  %1501 = vmatpush1.msra.mxu0 0.0
  %1502 = vmatprep.subr.mxu0 0.0
  %1503 = vmatpush1.msra.mxu0 0.0
  %1504 = vmatprep.subr.mxu0 0.0
  %1505 = vmatpush1.msra.mxu0 0.0
  %1506 = vmatprep.subr.mxu0 0.0
  %1507 = vmatpush1.msra.mxu0 0.0
  %1508 = vmatprep.subr.mxu0 0.0
  %1509 = vmatpush1.msra.mxu0 0.0
  %1510 = vmatprep.subr.mxu0 0.0
  %1511 = vmatpush1.msra.mxu0 0.0
  %1512 = vmatprep.subr.mxu0 0.0
  %1513 = vmatpush1.msra.mxu0 0.0
  %1514 = vmatprep.subr.mxu0 0.0
  %1515 = vmatpush1.msra.mxu0 0.0
  %1516 = vmatprep.subr.mxu0 0.0
  %1517 = vmatpush1.msra.mxu0 0.0
  %1518 = vmatprep.subr.mxu0 0.0
  %1519 = vmatpush1.msra.mxu0 0.0
  %1520 = vmatprep.subr.mxu0 0.0
  %1521 = vmatpush1.msra.mxu0 0.0
  %1522 = vmatprep.subr.mxu0 0.0
  %1523 = vmatpush1.msra.mxu0 0.0
  %1524 = vmatprep.subr.mxu0 0.0
  %1525 = vmatpush1.msra.mxu0 0.0
  %1526 = vmatprep.subr.mxu0 0.0
  %1527 = vmatpush1.msra.mxu0 0.0
  %1528 = vmatprep.subr.mxu0 0.0
  %1529 = vmatpush1.msra.mxu0 0.0
  %1530 = vmatprep.subr.mxu0 0.0
  %1531 = vmatpush1.msra.mxu0 0.0
  %1532 = vmatprep.subr.mxu0 0.0
  %1533 = vmatpush1.msra.mxu0 0.0
  %1534 = vmatprep.subr.mxu0 0.0
  %1535 = vmatpush1.msra.mxu0 0.0
  %1536 = vmatprep.subr.mxu0 0.0
  %1537 = vmatpush1.msra.mxu0 0.0
  %1538 = vmatprep.subr.mxu0 0.0
  %1539 = vmatpush1.msra.mxu0 0.0
  %1540 = vmatprep.subr.mxu0 0.0
  %1541 = vmatpush1.msra.mxu0 0.0
  %1542 = vmatprep.subr.mxu0 0.0
  %1543 = vmatpush1.msra.mxu0 0.0
  %1544 = vmatprep.subr.mxu0 0.0
  %1545 = vmatpush1.msra.mxu0 0.0
  %1546 = vmatprep.subr.mxu0 0.0
  %1547 = vmatpush1.msra.mxu0 0.0
  %1548 = vmatprep.subr.mxu0 0.0
  %1549 = vmatpush1.msra.mxu0 0.0
  %1550 = vmatprep.subr.mxu0 0.0
  %1551 = vmatpush1.msra.mxu0 0.0
  %1552 = vmatprep.mubr.f32.mxu0 0.0
  %1553 = vmatmul.mubr.f32.gmra.mrb[0].mxu0 %v1486
  %v1554 = vpop.f32.mrb[0].mxu0
  %v1555 = vadd.f32 0.0, %v1554
  %v1556 = vpop.f32.mrb[0].mxu0
  %1557 = vdwg.mxu0
  %1558 = vrot.lane.b32.xlu0 %v347, 112
  %v1559 = vpop.permute.xlu0 %1558
  %v1562 = vsel %vm28, %v1100, 0
  %1564 = vmatprep.subr.mxu0 0.0
  %1565 = vmatpush1.msra.mxu0 %v1559
  %1566 = vmatprep.subr.mxu0 0.0
  %1567 = vmatpush1.msra.mxu0 0.0
  %1568 = vmatprep.subr.mxu0 0.0
  %1569 = vmatpush1.msra.mxu0 0.0
  %1570 = vmatprep.subr.mxu0 0.0
  %1571 = vmatpush1.msra.mxu0 0.0
  %1572 = vmatprep.subr.mxu0 0.0
  %1573 = vmatpush1.msra.mxu0 0.0
  %1574 = vmatprep.subr.mxu0 0.0
  %1575 = vmatpush1.msra.mxu0 0.0
  %1576 = vmatprep.subr.mxu0 0.0
  %1577 = vmatpush1.msra.mxu0 0.0
  %1578 = vmatprep.subr.mxu0 0.0
  %1579 = vmatpush1.msra.mxu0 0.0
  %1580 = vmatprep.subr.mxu0 0.0
  %1581 = vmatpush1.msra.mxu0 0.0
  %1582 = vmatprep.subr.mxu0 0.0
  %1583 = vmatpush1.msra.mxu0 0.0
  %1584 = vmatprep.subr.mxu0 0.0
  %1585 = vmatpush1.msra.mxu0 0.0
  %1586 = vmatprep.subr.mxu0 0.0
  %1587 = vmatpush1.msra.mxu0 0.0
  %1588 = vmatprep.subr.mxu0 0.0
  %1589 = vmatpush1.msra.mxu0 0.0
  %1590 = vmatprep.subr.mxu0 0.0
  %1591 = vmatpush1.msra.mxu0 0.0
  %1592 = vmatprep.subr.mxu0 0.0
  %1593 = vmatpush1.msra.mxu0 0.0
  %1594 = vmatprep.subr.mxu0 0.0
  %1595 = vmatpush1.msra.mxu0 0.0
  %1596 = vmatprep.subr.mxu0 0.0
  %1597 = vmatpush1.msra.mxu0 0.0
  %1598 = vmatprep.subr.mxu0 0.0
  %1599 = vmatpush1.msra.mxu0 0.0
  %1600 = vmatprep.subr.mxu0 0.0
  %1601 = vmatpush1.msra.mxu0 0.0
  %1602 = vmatprep.subr.mxu0 0.0
  %1603 = vmatpush1.msra.mxu0 0.0
  %1604 = vmatprep.subr.mxu0 0.0
  %1605 = vmatpush1.msra.mxu0 0.0
  %1606 = vmatprep.subr.mxu0 0.0
  %1607 = vmatpush1.msra.mxu0 0.0
  %1608 = vmatprep.subr.mxu0 0.0
  %1609 = vmatpush1.msra.mxu0 0.0
  %1610 = vmatprep.subr.mxu0 0.0
  %1611 = vmatpush1.msra.mxu0 0.0
  %1612 = vmatprep.subr.mxu0 0.0
  %1613 = vmatpush1.msra.mxu0 0.0
  %1614 = vmatprep.subr.mxu0 0.0
  %1615 = vmatpush1.msra.mxu0 0.0
  %1616 = vmatprep.subr.mxu0 0.0
  %1617 = vmatpush1.msra.mxu0 0.0
  %1618 = vmatprep.subr.mxu0 0.0
  %1619 = vmatpush1.msra.mxu0 0.0
  %1620 = vmatprep.subr.mxu0 0.0
  %1621 = vmatpush1.msra.mxu0 0.0
  %1622 = vmatprep.subr.mxu0 0.0
  %1623 = vmatpush1.msra.mxu0 0.0
  %1624 = vmatprep.subr.mxu0 0.0
  %1625 = vmatpush1.msra.mxu0 0.0
  %1626 = vmatprep.subr.mxu0 0.0
  %1627 = vmatpush1.msra.mxu0 0.0
  %1628 = vmatprep.mubr.f32.mxu0 0.0
  %1629 = vmatmul.mubr.f32.gmra.mrb[0].mxu0 %v1562
  %v1630 = vpop.f32.mrb[0].mxu0
  %v1631 = vadd.f32 0.0, %v1630
  %v1632 = vpop.f32.mrb[0].mxu0
  %1633 = vdwg.mxu0
  %1634 = vrot.lane.b32.xlu0 %v393, 112
  %v1635 = vpop.permute.xlu0 %1634
  %v1638 = vsel %vm28, %v1101, 0
  %1640 = vmatprep.subr.mxu0 0.0
  %1641 = vmatpush1.msra.mxu0 %v1635
  %1642 = vmatprep.subr.mxu0 0.0
  %1643 = vmatpush1.msra.mxu0 0.0
  %1644 = vmatprep.subr.mxu0 0.0
  %1645 = vmatpush1.msra.mxu0 0.0
  %1646 = vmatprep.subr.mxu0 0.0
  %1647 = vmatpush1.msra.mxu0 0.0
  %1648 = vmatprep.subr.mxu0 0.0
  %1649 = vmatpush1.msra.mxu0 0.0
  %1650 = vmatprep.subr.mxu0 0.0
  %1651 = vmatpush1.msra.mxu0 0.0
  %1652 = vmatprep.subr.mxu0 0.0
  %1653 = vmatpush1.msra.mxu0 0.0
  %1654 = vmatprep.subr.mxu0 0.0
  %1655 = vmatpush1.msra.mxu0 0.0
  %1656 = vmatprep.subr.mxu0 0.0
  %1657 = vmatpush1.msra.mxu0 0.0
  %1658 = vmatprep.subr.mxu0 0.0
  %1659 = vmatpush1.msra.mxu0 0.0
  %1660 = vmatprep.subr.mxu0 0.0
  %1661 = vmatpush1.msra.mxu0 0.0
  %1662 = vmatprep.subr.mxu0 0.0
  %1663 = vmatpush1.msra.mxu0 0.0
  %1664 = vmatprep.subr.mxu0 0.0
  %1665 = vmatpush1.msra.mxu0 0.0
  %1666 = vmatprep.subr.mxu0 0.0
  %1667 = vmatpush1.msra.mxu0 0.0
  %1668 = vmatprep.subr.mxu0 0.0
  %1669 = vmatpush1.msra.mxu0 0.0
  %1670 = vmatprep.subr.mxu0 0.0
  %1671 = vmatpush1.msra.mxu0 0.0
  %1672 = vmatprep.subr.mxu0 0.0
  %1673 = vmatpush1.msra.mxu0 0.0
  %1674 = vmatprep.subr.mxu0 0.0
  %1675 = vmatpush1.msra.mxu0 0.0
  %1676 = vmatprep.subr.mxu0 0.0
  %1677 = vmatpush1.msra.mxu0 0.0
  %1678 = vmatprep.subr.mxu0 0.0
  %1679 = vmatpush1.msra.mxu0 0.0
  %1680 = vmatprep.subr.mxu0 0.0
  %1681 = vmatpush1.msra.mxu0 0.0
  %1682 = vmatprep.subr.mxu0 0.0
  %1683 = vmatpush1.msra.mxu0 0.0
  %1684 = vmatprep.subr.mxu0 0.0
  %1685 = vmatpush1.msra.mxu0 0.0
  %1686 = vmatprep.subr.mxu0 0.0
  %1687 = vmatpush1.msra.mxu0 0.0
  %1688 = vmatprep.subr.mxu0 0.0
  %1689 = vmatpush1.msra.mxu0 0.0
  %1690 = vmatprep.subr.mxu0 0.0
  %1691 = vmatpush1.msra.mxu0 0.0
  %1692 = vmatprep.subr.mxu0 0.0
  %1693 = vmatpush1.msra.mxu0 0.0
  %1694 = vmatprep.subr.mxu0 0.0
  %1695 = vmatpush1.msra.mxu0 0.0
  %1696 = vmatprep.subr.mxu0 0.0
  %1697 = vmatpush1.msra.mxu0 0.0
  %1698 = vmatprep.subr.mxu0 0.0
  %1699 = vmatpush1.msra.mxu0 0.0
  %1700 = vmatprep.subr.mxu0 0.0
  %1701 = vmatpush1.msra.mxu0 0.0
  %1702 = vmatprep.subr.mxu0 0.0
  %1703 = vmatpush1.msra.mxu0 0.0
  %1704 = vmatprep.mubr.f32.mxu0 0.0
  %1705 = vmatmul.mubr.f32.gmra.mrb[0].mxu0 %v1638
  %v1706 = vpop.f32.mrb[0].mxu0
  %v1707 = vadd.f32 0.0, %v1706
  %v1708 = vpop.f32.mrb[0].mxu0
  %1709 = vdwg.mxu0
  %1710 = vst.msk [vmem:[%s2] sm:$0xff] %vm28, %v1175
  %1711 = vst.msk [vmem:[%s2 + $0x8] sm:$0xff] %vm28, %v1251
  %1712 = vst.msk [vmem:[%s2 + $0x10] sm:$0xff] %vm28, %v1327
  %1713 = vst.msk [vmem:[%s2 + $0x18] sm:$0xff] %vm28, %v1403
  %1714 = vst.msk [vmem:[%s2 + $0x20] sm:$0xff] %vm28, %v1479
  %1715 = vst.msk [vmem:[%s2 + $0x28] sm:$0xff] %vm28, %v1555
  %1716 = vst.msk [vmem:[%s2 + $0x30] sm:$0xff] %vm28, %v1631
  %1717 = vst.msk [vmem:[%s2 + $0x38] sm:$0xff] %vm28, %v1707
  // Predicated region
  $region10: #{multihead_forward.1} parent=0 // pred_check
    _
  $region11: #{multihead_forward.1} parent=0 // pred_check_branch
    %1719 = sbr.rel (0) target = $region13
  $region12: #{multihead_forward.1} parent=0 // pred_region
    _
  $region13: #{multihead_forward.1} parent=0 // pred_fallthru
    _
  // Predicated region
  $region14: #{multihead_forward.1} parent=0 // pred_check
    _
  $region15: #{multihead_forward.1} parent=0 // pred_check_branch
    %1721 = sbr.rel (0) target = $region17
  $region16: #{multihead_forward.1} parent=0 // pred_region
    _
  $region17: #{multihead_forward.1} parent=0 // pred_fallthru
    _

</llo_original>
